<compile_context>
chip_gen: v7x
topology: tpu7x:2x2x1
jax: 0.10.0
libtpu: 0.0.40
codegen_flags: <defaults>
</compile_context>

<pallas_src>
import jax
import jax.numpy as jnp
from jax.experimental import pallas as pl
from jax.experimental.pallas import tpu as pltpu

BN_EPS = 1e-5
COMPUTE_DTYPE = jnp.bfloat16      # MXU-native; accumulation stays in f32


# ----------------------------------------------------------------------------
# Fused kernel: one grid step == one batch tile.  Five back-to-back MXU matmuls,
# everything stays in VMEM / vregs.
# ----------------------------------------------------------------------------
def _fused_head_kernel(x_ref, pool_ref, w1_ref, b1_ref, w2_ref, b2_ref,
                       w3_ref, b3_ref, wfc_ref, bfc_ref, feat_ref, logit_ref):
    # Stage 1: 1x1 conv (+BN folded) as block-diagonal matmul, bias + ReLU.
    y1 = jnp.dot(x_ref[...], w1_ref[...], preferred_element_type=jnp.float32)
    y1 = jnp.maximum(y1 + b1_ref[...], 0.0).astype(w2_ref.dtype)   # [rows, kk*mc]

    # Stage 2: kxk stride-k conv (+BN folded) == im2col matmul, bias + ReLU.
    y2 = jnp.dot(y1, w2_ref[...], preferred_element_type=jnp.float32)
    y2 = jnp.maximum(y2 + b2_ref[...], 0.0).astype(w3_ref.dtype)   # [rows, mc]

    # Stage 3: 1x1 conv (+BN folded) + ReLU.
    y3 = jnp.dot(y2, w3_ref[...], preferred_element_type=jnp.float32)
    y3 = jnp.maximum(y3 + b3_ref[...], 0.0)                        # [rows, Cout] f32

    # AdaptiveAvgPool2d((1,1)) as a small averaging matmul (no relayout needed).
    pooled = jnp.dot(pool_ref[...], y3, preferred_element_type=jnp.float32)  # [bt, Cout]
    feat_ref[...] = pooled.astype(feat_ref.dtype)

    # Linear (class dim padded to 128 lanes -> unmasked lane-dense store).
    logits = jnp.dot(pooled.astype(wfc_ref.dtype), wfc_ref[...],
                     preferred_element_type=jnp.float32) + bfc_ref[...]
    logit_ref[...] = logits.astype(logit_ref.dtype)


# ----------------------------------------------------------------------------
# Parameter folding / input arrangement (trace-time, XLA side)
# ----------------------------------------------------------------------------
def _fold_bn_into_weight(conv_w_2d, conv_b, g, b, m, v, eps=BN_EPS):
    """conv_w_2d: [O, K] flattened filter.  Returns (scaled weight, bias)."""
    s = g / jnp.sqrt(v + eps)
    w = conv_w_2d * s[:, None]
    bias = b - m * s + conv_b * s
    return w, bias


def _prep_params(p, k, num_classes, dtype=COMPUTE_DTYPE):
    mc = p["conv1_w"].shape[0]
    c_in = p["conv1_w"].shape[1]
    c_out = p["conv3_w"].shape[0]
    kk = k * k

    # Stage 1: fold BN1, then expand to block-diagonal so it acts positionwise on
    # the im2col rows: W1_bd[p*Cin:(p+1)*Cin, p*mc:(p+1)*mc] = W1.
    w1, b1 = _fold_bn_into_weight(p["conv1_w"].reshape(mc, c_in), p["conv1_b"],
                                  p["bn1_g"], p["bn1_b"], p["bn1_m"], p["bn1_v"])
    w1 = w1.T                                                  # [Cin, mc]
    w1_bd = jnp.kron(jnp.eye(kk, dtype=w1.dtype), w1)          # [kk*Cin, kk*mc]
    b1_tiled = jnp.tile(b1.reshape(1, mc), (1, kk))            # [1, kk*mc]

    # Stage 2: conv2_w [O, I, kh, kw] -> scale per O -> [kh, kw, I, O] -> [kk*I, O].
    s2 = p["bn2_g"] / jnp.sqrt(p["bn2_v"] + BN_EPS)
    w2 = (p["conv2_w"] * s2[:, None, None, None]).transpose(2, 3, 1, 0)
    w2 = w2.reshape(kk * mc, mc)
    b2 = p["bn2_b"] - p["bn2_m"] * s2 + p["conv2_b"] * s2

    # Stage 3.
    w3, b3 = _fold_bn_into_weight(p["conv3_w"].reshape(c_out, mc), p["conv3_b"],
                                  p["bn3_g"], p["bn3_b"], p["bn3_m"], p["bn3_v"])
    w3 = w3.T                                                  # [mc, Cout]

    # FC padded to a multiple of 128 output lanes.
    npad = 128 * ((num_classes + 127) // 128)
    wfc = jnp.zeros((c_out, npad), jnp.float32).at[:, :num_classes].set(p["fc_w"].T)
    bfc = jnp.zeros((1, npad), jnp.float32).at[0, :num_classes].set(p["fc_b"])

    return dict(
        w1=w1_bd.astype(dtype), b1=b1_tiled.astype(jnp.float32),
        w2=w2.astype(dtype), b2=b2.reshape(1, mc).astype(jnp.float32),
        w3=w3.astype(dtype), b3=b3.reshape(1, c_out).astype(jnp.float32),
        wfc=wfc.astype(dtype), bfc=bfc.astype(jnp.float32),
        npad=npad, mc=mc, c_in=c_in, c_out=c_out,
    )


def _arrange_input(x_nchw, k, dtype=COMPUTE_DTYPE):
    """NCHW -> lane-dense im2col rows [B*Hk*Wk, k*k*Cin].

    Row (b, hk, wk) holds, for each patch offset p = kh*k + kw, the Cin input
    channels at spatial position (hk*k + kh, wk*k + kw)."""
    B, C, H, W = x_nchw.shape
    Hk, Wk = H // k, W // k
    # Crop (matches PyTorch's floor behavior of the stride-k conv; the 1x1 conv is
    # positionwise so cropping before stage 1 is equivalent).
    x = x_nchw[:, :, : Hk * k, : Wk * k]
    x = jnp.transpose(x, (0, 2, 3, 1))                         # NHWC
    x = x.reshape(B, Hk, k, Wk, k, C).transpose(0, 1, 3, 2, 4, 5)  # [B,Hk,Wk,kh,kw,C]
    x = x.reshape(B * Hk * Wk, k * k * C)
    return x.astype(dtype), Hk, Wk


# ----------------------------------------------------------------------------
# Forward
# ----------------------------------------------------------------------------
def middle_classifier_forward(x_nchw, p, kernel_size, num_classes, batch_tile=8):
    B = x_nchw.shape[0]
    k = kernel_size
    w = _prep_params(p, k, num_classes)
    x_flat, Hk, Wk = _arrange_input(x_nchw, k)
    hw = Hk * Wk
    kcin = k * k * w["c_in"]
    mc, c_out, npad = w["mc"], w["c_out"], w["npad"]

    bt = B if B <= batch_tile else batch_tile
    # TODO(synk): pad the batch when B is large and not a multiple of the tile.
    assert B % bt == 0, "batch must be divisible by the batch tile"
    rows = bt * hw

    # Averaging matrix: pooled[j] = mean over the hw im2col rows of image j in the tile.
    pool_mat = jnp.kron(jnp.eye(bt, dtype=jnp.float32),
                        jnp.full((1, hw), 1.0 / hw, jnp.float32))   # [bt, bt*hw]

    def full_spec(arr):
        nd = arr.ndim
        return pl.BlockSpec(arr.shape, lambda i, _nd=nd: (0,) * _nd)

    feat2d, logits_pad = pl.pallas_call(
        _fused_head_kernel,
        out_shape=(
            jax.ShapeDtypeStruct((B, c_out), jnp.float32),
            jax.ShapeDtypeStruct((B, npad), jnp.float32),
        ),
        grid=(B // bt,),
        in_specs=[
            pl.BlockSpec((rows, kcin), lambda i: (i, 0)),   # im2col rows for this tile
            full_spec(pool_mat),
            full_spec(w["w1"]), full_spec(w["b1"]),
            full_spec(w["w2"]), full_spec(w["b2"]),
            full_spec(w["w3"]), full_spec(w["b3"]),
            full_spec(w["wfc"]), full_spec(w["bfc"]),
        ],
        out_specs=(
            pl.BlockSpec((bt, c_out), lambda i: (i, 0)),
            pl.BlockSpec((bt, npad), lambda i: (i, 0)),
        ),
        compiler_params=pltpu.CompilerParams(
            dimension_semantics=("parallel",),   # shard batch tiles across TCs on v7x
        ),
    )(x_flat, pool_mat, w["w1"], w["b1"], w["w2"], w["b2"],
      w["w3"], w["b3"], w["wfc"], w["bfc"])

    middle_feature = feat2d.reshape(B, c_out, 1, 1)          # NCHW (1,1) spatial
    logits = logits_pad[:, :num_classes]                     # drop lane padding
    return middle_feature, logits


# ----------------------------------------------------------------------------
# Deterministic synthetic parameters (PyTorch shapes: OIHW conv, [out,in] linear)
# ----------------------------------------------------------------------------
def init_params(key, channel_in, channel_out, kernel_size, num_classes):
    mc = channel_out // 4
    ks = jax.random.split(key, 20)
    u = lambda k, shape, s: jax.random.uniform(k, shape, jnp.float32, -s, s)
    n = lambda k, shape: jax.random.normal(k, shape, jnp.float32)
    p = {}
    # NOTE: BatchNorm is implemented in inference mode (running stats).
    p["conv1_w"] = u(ks[0], (mc, channel_in, 1, 1), 0.1)
    p["conv1_b"] = u(ks[1], (mc,), 0.1)
    p["bn1_g"] = 1.0 + 0.1 * n(ks[2], (mc,))
    p["bn1_b"] = 0.05 * n(ks[3], (mc,))
    p["bn1_m"] = 0.05 * n(ks[4], (mc,))
    p["bn1_v"] = 0.9 + 0.2 * jax.random.uniform(ks[5], (mc,), jnp.float32)

    p["conv2_w"] = u(ks[6], (mc, mc, kernel_size, kernel_size), 0.05)
    p["conv2_b"] = u(ks[7], (mc,), 0.05)
    p["bn2_g"] = 1.0 + 0.1 * n(ks[8], (mc,))
    p["bn2_b"] = 0.05 * n(ks[9], (mc,))
    p["bn2_m"] = 0.05 * n(ks[10], (mc,))
    p["bn2_v"] = 0.9 + 0.2 * jax.random.uniform(ks[11], (mc,), jnp.float32)

    p["conv3_w"] = u(ks[12], (channel_out, mc, 1, 1), 0.05)
    p["conv3_b"] = u(ks[13], (channel_out,), 0.05)
    p["bn3_g"] = 1.0 + 0.1 * n(ks[14], (channel_out,))
    p["bn3_b"] = 0.05 * n(ks[15], (channel_out,))
    p["bn3_m"] = 0.05 * n(ks[16], (channel_out,))
    p["bn3_v"] = 0.9 + 0.2 * jax.random.uniform(ks[17], (channel_out,), jnp.float32)

    p["fc_w"] = u(ks[18], (num_classes, channel_out), 0.05)
    p["fc_b"] = u(ks[19], (num_classes,), 0.05)
    return p


# ----------------------------------------------------------------------------
# Pure-JAX f32 reference (lax.conv on NCHW) for correctness checking
# ----------------------------------------------------------------------------
def reference_forward(x, p, kernel_size, eps=BN_EPS):
    def bn(y, g, b, m, v):
        sh = (1, -1, 1, 1)
        return (y - m.reshape(sh)) / jnp.sqrt(v.reshape(sh) + eps) * g.reshape(sh) + b.reshape(sh)

    def conv(y, w, b, stride):
        out = jax.lax.conv_general_dilated(
            y, w, (stride, stride), "VALID",
            dimension_numbers=("NCHW", "OIHW", "NCHW"))
        return out + b.reshape(1, -1, 1, 1)

    y = jax.nn.relu(bn(conv(x, p["conv1_w"], p["conv1_b"], 1),
                       p["bn1_g"], p["bn1_b"], p["bn1_m"], p["bn1_v"]))
    y = jax.nn.relu(bn(conv(y, p["conv2_w"], p["conv2_b"], kernel_size),
                       p["bn2_g"], p["bn2_b"], p["bn2_m"], p["bn2_v"]))
    y = jax.nn.relu(bn(conv(y, p["conv3_w"], p["conv3_b"], 1),
                       p["bn3_g"], p["bn3_b"], p["bn3_m"], p["bn3_v"]))
    feat = jnp.mean(y, axis=(2, 3), keepdims=True)
    logits = feat.reshape(feat.shape[0], -1) @ p["fc_w"].T + p["fc_b"]
    return feat, logits


if __name__ == "__main__":
    # block.expansion = 1, in_size = 32, out_size = 512 (so channel_out matches the
    # Linear's 512*expansion in_features), kernel_size = 2.
    expansion = 1
    in_size, out_size, kernel_size, num_classes = 32, 512, 2, 100
    channel_in = in_size * expansion
    channel_out = out_size * expansion
    B, H, W = 2, 8, 8

    key = jax.random.PRNGKey(0)
    kx, kp = jax.random.split(key)
    x = jax.random.normal(kx, (B, channel_in, H, W), jnp.float32)
    params = init_params(kp, channel_in, channel_out, kernel_size, num_classes)

    fwd = jax.jit(lambda xx: middle_classifier_forward(xx, params, kernel_size, num_classes))
    feat, logits = fwd(x)
    jax.block_until_ready((feat, logits))

    assert feat.shape == (B, channel_out, 1, 1)
    assert logits.shape == (B, num_classes)

    ref_feat, ref_logits = reference_forward(x, params, kernel_size)
    # bf16 activations/weights with f32 accumulation -> looser tolerance than pure f32.
    assert jnp.allclose(feat, ref_feat, atol=2e-2, rtol=2e-2)
    assert jnp.allclose(logits, ref_logits, atol=2e-2, rtol=2e-2)

    print("KERNEL_OK")
</pallas_src>

<mosaic_0001>
module attributes {stable_mosaic.version = 11 : i64} {
  func.func @_fused_head_kernel(%arg0: i32, %arg1: memref<32x128xbf16, #tpu.memory_space<vmem>>, %arg2: memref<2x32xf32, #tpu.memory_space<vmem>>, %arg3: memref<128x512xbf16, #tpu.memory_space<vmem>>, %arg4: memref<1x512xf32, #tpu.memory_space<vmem>>, %arg5: memref<512x128xbf16, #tpu.memory_space<vmem>>, %arg6: memref<1x128xf32, #tpu.memory_space<vmem>>, %arg7: memref<128x512xbf16, #tpu.memory_space<vmem>>, %arg8: memref<1x512xf32, #tpu.memory_space<vmem>>, %arg9: memref<512x128xbf16, #tpu.memory_space<vmem>>, %arg10: memref<1x128xf32, #tpu.memory_space<vmem>>, %arg11: memref<2x512xf32, #tpu.memory_space<vmem>>, %arg12: memref<2x128xf32, #tpu.memory_space<vmem>>) attributes {dimension_semantics = [#tpu.dimension_semantics<parallel>], iteration_bounds = array<i64: 1>, scalar_prefetch = 0 : i64, scratch_operands = 0 : i64, tpu.core_type = #tpu.core_type<tc>, window_params = [{transform_indices = @transform_0, window_bounds = array<i64: 32, 128>}, {pipeline_mode = #tpu.pipeline_mode<synchronous>, transform_indices = @transform_1, window_bounds = array<i64: 2, 32>}, {pipeline_mode = #tpu.pipeline_mode<synchronous>, transform_indices = @transform_2, window_bounds = array<i64: 128, 512>}, {pipeline_mode = #tpu.pipeline_mode<synchronous>, transform_indices = @transform_3, window_bounds = array<i64: 1, 512>}, {pipeline_mode = #tpu.pipeline_mode<synchronous>, transform_indices = @transform_4, window_bounds = array<i64: 512, 128>}, {pipeline_mode = #tpu.pipeline_mode<synchronous>, transform_indices = @transform_5, window_bounds = array<i64: 1, 128>}, {pipeline_mode = #tpu.pipeline_mode<synchronous>, transform_indices = @transform_6, window_bounds = array<i64: 128, 512>}, {pipeline_mode = #tpu.pipeline_mode<synchronous>, transform_indices = @transform_7, window_bounds = array<i64: 1, 512>}, {pipeline_mode = #tpu.pipeline_mode<synchronous>, transform_indices = @transform_8, window_bounds = array<i64: 512, 128>}, {pipeline_mode = #tpu.pipeline_mode<synchronous>, transform_indices = @transform_9, window_bounds = array<i64: 1, 128>}, {transform_indices = @transform_10, window_bounds = array<i64: 2, 512>}, {transform_indices = @transform_11, window_bounds = array<i64: 2, 128>}]} {
    %c0 = arith.constant 0 : index
    %c0_0 = arith.constant 0 : index
    %0 = vector.load %arg1[%c0, %c0_0] : memref<32x128xbf16, #tpu.memory_space<vmem>>, vector<32x128xbf16>
    %c0_1 = arith.constant 0 : index
    %c0_2 = arith.constant 0 : index
    %1 = vector.load %arg3[%c0_1, %c0_2] : memref<128x512xbf16, #tpu.memory_space<vmem>>, vector<128x512xbf16>
    %cst = arith.constant dense<0.000000e+00> : vector<32x512xf32>
    %2 = tpu.matmul %0, %1, %cst {dimension_numbers = #tpu.dot_dimension_numbers<[1], [0], [0], [1], [0, 0, 1, 1], [], []>} : vector<32x128xbf16>, vector<128x512xbf16>, vector<32x512xf32> -> vector<32x512xf32>
    %c0_3 = arith.constant 0 : index
    %c0_4 = arith.constant 0 : index
    %3 = vector.load %arg4[%c0_3, %c0_4] : memref<1x512xf32, #tpu.memory_space<vmem>>, vector<1x512xf32>
    %4 = vector.broadcast %3 : vector<1x512xf32> to vector<32x512xf32>
    %5 = arith.addf %2, %4 : vector<32x512xf32>
    %cst_5 = arith.constant 0.000000e+00 : f32
    %6 = vector.broadcast %cst_5 : f32 to vector<32x512xf32>
    %7 = arith.maximumf %5, %6 : vector<32x512xf32>
    %8 = arith.truncf %7 : vector<32x512xf32> to vector<32x512xbf16>
    %c0_6 = arith.constant 0 : index
    %c0_7 = arith.constant 0 : index
    %9 = vector.load %arg5[%c0_6, %c0_7] : memref<512x128xbf16, #tpu.memory_space<vmem>>, vector<512x128xbf16>
    %cst_8 = arith.constant dense<0.000000e+00> : vector<32x128xf32>
    %10 = tpu.matmul %8, %9, %cst_8 {dimension_numbers = #tpu.dot_dimension_numbers<[1], [0], [0], [1], [0, 0, 1, 1], [], []>} : vector<32x512xbf16>, vector<512x128xbf16>, vector<32x128xf32> -> vector<32x128xf32>
    %c0_9 = arith.constant 0 : index
    %c0_10 = arith.constant 0 : index
    %11 = vector.load %arg6[%c0_9, %c0_10] : memref<1x128xf32, #tpu.memory_space<vmem>>, vector<1x128xf32>
    %12 = vector.broadcast %11 : vector<1x128xf32> to vector<32x128xf32>
    %13 = arith.addf %10, %12 : vector<32x128xf32>
    %cst_11 = arith.constant 0.000000e+00 : f32
    %14 = vector.broadcast %cst_11 : f32 to vector<32x128xf32>
    %15 = arith.maximumf %13, %14 : vector<32x128xf32>
    %16 = arith.truncf %15 : vector<32x128xf32> to vector<32x128xbf16>
    %c0_12 = arith.constant 0 : index
    %c0_13 = arith.constant 0 : index
    %17 = vector.load %arg7[%c0_12, %c0_13] : memref<128x512xbf16, #tpu.memory_space<vmem>>, vector<128x512xbf16>
    %cst_14 = arith.constant dense<0.000000e+00> : vector<32x512xf32>
    %18 = tpu.matmul %16, %17, %cst_14 {dimension_numbers = #tpu.dot_dimension_numbers<[1], [0], [0], [1], [0, 0, 1, 1], [], []>} : vector<32x128xbf16>, vector<128x512xbf16>, vector<32x512xf32> -> vector<32x512xf32>
    %c0_15 = arith.constant 0 : index
    %c0_16 = arith.constant 0 : index
    %19 = vector.load %arg8[%c0_15, %c0_16] : memref<1x512xf32, #tpu.memory_space<vmem>>, vector<1x512xf32>
    %20 = vector.broadcast %19 : vector<1x512xf32> to vector<32x512xf32>
    %21 = arith.addf %18, %20 : vector<32x512xf32>
    %cst_17 = arith.constant 0.000000e+00 : f32
    %22 = vector.broadcast %cst_17 : f32 to vector<32x512xf32>
    %23 = arith.maximumf %21, %22 : vector<32x512xf32>
    %c0_18 = arith.constant 0 : index
    %c0_19 = arith.constant 0 : index
    %24 = vector.load %arg2[%c0_18, %c0_19] : memref<2x32xf32, #tpu.memory_space<vmem>>, vector<2x32xf32>
    %cst_20 = arith.constant dense<0.000000e+00> : vector<2x512xf32>
    %25 = tpu.matmul %24, %23, %cst_20 {dimension_numbers = #tpu.dot_dimension_numbers<[1], [0], [0], [1], [0, 0, 1, 1], [], []>} : vector<2x32xf32>, vector<32x512xf32>, vector<2x512xf32> -> vector<2x512xf32>
    %c0_21 = arith.constant 0 : index
    %c0_22 = arith.constant 0 : index
    %26 = vector.load %arg11[%c0_21, %c0_22] : memref<2x512xf32, #tpu.memory_space<vmem>>, vector<2x512xf32>
    tpu.vector_store %arg11[%c0_21, %c0_22], %25 {strides = array<i32>} : memref<2x512xf32, #tpu.memory_space<vmem>>, vector<2x512xf32>,
    %27 = arith.truncf %25 : vector<2x512xf32> to vector<2x512xbf16>
    %c0_23 = arith.constant 0 : index
    %c0_24 = arith.constant 0 : index
    %28 = vector.load %arg9[%c0_23, %c0_24] : memref<512x128xbf16, #tpu.memory_space<vmem>>, vector<512x128xbf16>
    %cst_25 = arith.constant dense<0.000000e+00> : vector<2x128xf32>
    %29 = tpu.matmul %27, %28, %cst_25 {dimension_numbers = #tpu.dot_dimension_numbers<[1], [0], [0], [1], [0, 0, 1, 1], [], []>} : vector<2x512xbf16>, vector<512x128xbf16>, vector<2x128xf32> -> vector<2x128xf32>
    %c0_26 = arith.constant 0 : index
    %c0_27 = arith.constant 0 : index
    %30 = vector.load %arg10[%c0_26, %c0_27] : memref<1x128xf32, #tpu.memory_space<vmem>>, vector<1x128xf32>
    %31 = vector.broadcast %30 : vector<1x128xf32> to vector<2x128xf32>
    %32 = arith.addf %29, %31 : vector<2x128xf32>
    %c0_28 = arith.constant 0 : index
    %c0_29 = arith.constant 0 : index
    %33 = vector.load %arg12[%c0_28, %c0_29] : memref<2x128xf32, #tpu.memory_space<vmem>>, vector<2x128xf32>
    tpu.vector_store %arg12[%c0_28, %c0_29], %32 {strides = array<i32>} : memref<2x128xf32, #tpu.memory_space<vmem>>, vector<2x128xf32>,
    return
  }
  func.func @transform_0(%arg0: i32) -> (i32, i32) {
    %c0_i32 = arith.constant 0 : i32
    %c0_i32_0 = arith.constant 0 : i32
    return %arg0, %c0_i32 : i32, i32
  }
  func.func @transform_1(%arg0: i32) -> (i32, i32) {
    %c0_i32 = arith.constant 0 : i32
    %c0_i32_0 = arith.constant 0 : i32
    %c0_i32_1 = arith.constant 0 : i32
    return %c0_i32, %c0_i32_0 : i32, i32
  }
  func.func @transform_2(%arg0: i32) -> (i32, i32) {
    %c0_i32 = arith.constant 0 : i32
    %c0_i32_0 = arith.constant 0 : i32
    %c0_i32_1 = arith.constant 0 : i32
    return %c0_i32, %c0_i32_0 : i32, i32
  }
  func.func @transform_3(%arg0: i32) -> (i32, i32) {
    %c0_i32 = arith.constant 0 : i32
    %c0_i32_0 = arith.constant 0 : i32
    %c0_i32_1 = arith.constant 0 : i32
    return %c0_i32, %c0_i32_0 : i32, i32
  }
  func.func @transform_4(%arg0: i32) -> (i32, i32) {
    %c0_i32 = arith.constant 0 : i32
    %c0_i32_0 = arith.constant 0 : i32
    %c0_i32_1 = arith.constant 0 : i32
    return %c0_i32, %c0_i32_0 : i32, i32
  }
  func.func @transform_5(%arg0: i32) -> (i32, i32) {
    %c0_i32 = arith.constant 0 : i32
    %c0_i32_0 = arith.constant 0 : i32
    %c0_i32_1 = arith.constant 0 : i32
    return %c0_i32, %c0_i32_0 : i32, i32
  }
  func.func @transform_6(%arg0: i32) -> (i32, i32) {
    %c0_i32 = arith.constant 0 : i32
    %c0_i32_0 = arith.constant 0 : i32
    %c0_i32_1 = arith.constant 0 : i32
    return %c0_i32, %c0_i32_0 : i32, i32
  }
  func.func @transform_7(%arg0: i32) -> (i32, i32) {
    %c0_i32 = arith.constant 0 : i32
    %c0_i32_0 = arith.constant 0 : i32
    %c0_i32_1 = arith.constant 0 : i32
    return %c0_i32, %c0_i32_0 : i32, i32
  }
  func.func @transform_8(%arg0: i32) -> (i32, i32) {
    %c0_i32 = arith.constant 0 : i32
    %c0_i32_0 = arith.constant 0 : i32
    %c0_i32_1 = arith.constant 0 : i32
    return %c0_i32, %c0_i32_0 : i32, i32
  }
  func.func @transform_9(%arg0: i32) -> (i32, i32) {
    %c0_i32 = arith.constant 0 : i32
    %c0_i32_0 = arith.constant 0 : i32
    %c0_i32_1 = arith.constant 0 : i32
    return %c0_i32, %c0_i32_0 : i32, i32
  }
  func.func @transform_10(%arg0: i32) -> (i32, i32) {
    %c0_i32 = arith.constant 0 : i32
    %c0_i32_0 = arith.constant 0 : i32
    return %arg0, %c0_i32 : i32, i32
  }
  func.func @transform_11(%arg0: i32) -> (i32, i32) {
    %c0_i32 = arith.constant 0 : i32
    %c0_i32_0 = arith.constant 0 : i32
    return %arg0, %c0_i32 : i32, i32
  }
}

</mosaic_0001>

<llo_original>
// kernel: _lambda_.1
$region0: #{_lambda_.1}
  #allocation0 [shape = 'u32[]', space=smem, size = 0x4, offset = 0x4, fixed_abs, tag = 'smem constant byte address 0x4 - core index']
  #allocation1 [shape = 'u32[144,128]{1,0:T(1,128)}', space=vmem, size = 0x12000, scoped, tag = 'internal scratch']
  %s0 = inlined_call_operand.vmem [shape: bf16[32,128], index: 0, kind: input, shape index: {}]
  %s1 = inlined_call_operand.vmem [shape: f32[2,32], index: 1, kind: input, shape index: {}]
  %s2 = inlined_call_operand.vmem [shape: bf16[128,512], index: 2, kind: input, shape index: {}]
  %s3 = inlined_call_operand.vmem [shape: f32[1,512], index: 3, kind: input, shape index: {}]
  %s4 = inlined_call_operand.vmem [shape: bf16[512,128], index: 4, kind: input, shape index: {}]
  %s5 = inlined_call_operand.vmem [shape: f32[1,128], index: 5, kind: input, shape index: {}]
  %s6 = inlined_call_operand.vmem [shape: bf16[128,512], index: 6, kind: input, shape index: {}]
  %s7 = inlined_call_operand.vmem [shape: f32[1,512], index: 7, kind: input, shape index: {}]
  %s8 = inlined_call_operand.vmem [shape: bf16[512,128], index: 8, kind: input, shape index: {}]
  %s9 = inlined_call_operand.vmem [shape: f32[1,128], index: 9, kind: input, shape index: {}]
  %s10 = inlined_call_operand.vmem [shape: f32[2,512], index: 10, kind: output, shape index: {0}]
  %s11 = inlined_call_operand.hbm [shape: f32[2,128], index: 11, kind: output, shape index: {1}]
  %12 = xla_tuple %s10, %s11
  %s13 = sld [smem:[#allocation0]]
  $region58: #{_lambda_.1} parent=0
    _
  %s15 = ssub.s32 1, %s13
  %s16 = scalar_select 0, %s15, %s13
  $region1: #{_lambda_.1} parent=0
    #allocation2 [shape = 'u8[1024]{0}', space=vmem, size = 0x400, scoped, tag = 'output window, operand 1, single buffered']
    #allocation3 [shape = 's32[1]{0}', space=sflag, size = 0x4, scoped, tag = 'scoped memory for _lambda_.1']
    %17 = vsyncpa [#allocation3], 0
    // Predicated region
    $region2: #{_lambda_.1} parent=1 // pred_check
      _
    $region3: #{_lambda_.1} parent=1 // pred_check_branch
      %19 = sbr.rel (0) target = $region5
    $region4: #{_lambda_.1} parent=1 // pred_region
      _
    $region5: #{_lambda_.1} parent=1 // pred_fallthru
      _
    // Predicated region
    $region6: #{_lambda_.1} parent=1 // pred_check
      _
    $region7: #{_lambda_.1} parent=1 // pred_check_branch
      %21 = sbr.rel (0) target = $region9
    $region8: #{_lambda_.1} parent=1 // pred_region
      _
    $region9: #{_lambda_.1} parent=1 // pred_fallthru
      _
    // Predicated region
    $region10: #{_lambda_.1} parent=1 // pred_check
      _
    $region11: #{_lambda_.1} parent=1 // pred_check_branch
      %23 = sbr.rel (0) target = $region13
    $region12: #{_lambda_.1} parent=1 // pred_region
      _
    $region13: #{_lambda_.1} parent=1 // pred_fallthru
      _
    // Predicated region
    $region14: #{_lambda_.1} parent=1 // pred_check
      _
    $region15: #{_lambda_.1} parent=1 // pred_check_branch
      %25 = sbr.rel (0) target = $region17
    $region16: #{_lambda_.1} parent=1 // pred_region
      _
    $region17: #{_lambda_.1} parent=1 // pred_fallthru
      _
    // Predicated region
    $region18: #{_lambda_.1} parent=1 // pred_check
      _
    $region19: #{_lambda_.1} parent=1 // pred_check_branch
      %27 = sbr.rel (0) target = $region21
    $region20: #{_lambda_.1} parent=1 // pred_region
      _
    $region21: #{_lambda_.1} parent=1 // pred_fallthru
      _
    // Predicated region
    $region22: #{_lambda_.1} parent=1 // pred_check
      _
    $region23: #{_lambda_.1} parent=1 // pred_check_branch
      %29 = sbr.rel (0) target = $region25
    $region24: #{_lambda_.1} parent=1 // pred_region
      _
    $region25: #{_lambda_.1} parent=1 // pred_fallthru
      _
    // Predicated region
    $region26: #{_lambda_.1} parent=1 // pred_check
      _
    $region27: #{_lambda_.1} parent=1 // pred_check_branch
      %31 = sbr.rel (0) target = $region29
    $region28: #{_lambda_.1} parent=1 // pred_region
      _
    $region29: #{_lambda_.1} parent=1 // pred_fallthru
      _
    // Predicated region
    $region30: #{_lambda_.1} parent=1 // pred_check
      _
    $region31: #{_lambda_.1} parent=1 // pred_check_branch
      %33 = sbr.rel (0) target = $region33
    $region32: #{_lambda_.1} parent=1 // pred_region
      _
    $region33: #{_lambda_.1} parent=1 // pred_fallthru
      _
    // Predicated region
    $region34: #{_lambda_.1} parent=1 // pred_check
      _
    $region35: #{_lambda_.1} parent=1 // pred_check_branch
      %35 = sbr.rel (0) target = $region37
    $region36: #{_lambda_.1} parent=1 // pred_region
      _
    $region37: #{_lambda_.1} parent=1 // pred_fallthru
      _
    // Predicated region
    $region38: #{_lambda_.1} parent=1 // pred_check
      _
    $region39: #{_lambda_.1} parent=1 // pred_check_branch
      %37 = sbr.rel (0) target = $region41
    $region40: #{_lambda_.1} parent=1 // pred_region
      _
    $region41: #{_lambda_.1} parent=1 // pred_fallthru
      _
    %v39 = vld [vmem:[%s0] sm:$0xf]
    %v40 = vld [vmem:[%s0 + $0x4] sm:$0xf]
    %v41 = vld [vmem:[%s0 + $0x8] sm:$0xf]
    %v42 = vld [vmem:[%s0 + $0xc] sm:$0xf]
    %v43 = vld [vmem:[%s2] sm:$0xff]
    %v44 = vld [vmem:[%s2 + $0x8] sm:$0xff]
    %v45 = vld [vmem:[%s2 + $0x10] sm:$0xff]
    %v46 = vld [vmem:[%s2 + $0x18] sm:$0xff]
    %v47 = vld [vmem:[%s2 + $0x20] sm:$0xff]
    %v48 = vld [vmem:[%s2 + $0x28] sm:$0xff]
    %v49 = vld [vmem:[%s2 + $0x30] sm:$0xff]
    %v50 = vld [vmem:[%s2 + $0x38] sm:$0xff]
    %v51 = vld [vmem:[%s2 + $0x40] sm:$0xff]
    %v52 = vld [vmem:[%s2 + $0x48] sm:$0xff]
    %v53 = vld [vmem:[%s2 + $0x50] sm:$0xff]
    %v54 = vld [vmem:[%s2 + $0x58] sm:$0xff]
    %v55 = vld [vmem:[%s2 + $0x60] sm:$0xff]
    %v56 = vld [vmem:[%s2 + $0x68] sm:$0xff]
    %v57 = vld [vmem:[%s2 + $0x70] sm:$0xff]
    %v58 = vld [vmem:[%s2 + $0x78] sm:$0xff]
    %v59 = vld [vmem:[%s2 + $0x80] sm:$0xff]
    %v60 = vld [vmem:[%s2 + $0x88] sm:$0xff]
    %v61 = vld [vmem:[%s2 + $0x90] sm:$0xff]
    %v62 = vld [vmem:[%s2 + $0x98] sm:$0xff]
    %v63 = vld [vmem:[%s2 + $0xa0] sm:$0xff]
    %v64 = vld [vmem:[%s2 + $0xa8] sm:$0xff]
    %v65 = vld [vmem:[%s2 + $0xb0] sm:$0xff]
    %v66 = vld [vmem:[%s2 + $0xb8] sm:$0xff]
    %v67 = vld [vmem:[%s2 + $0xc0] sm:$0xff]
    %v68 = vld [vmem:[%s2 + $0xc8] sm:$0xff]
    %v69 = vld [vmem:[%s2 + $0xd0] sm:$0xff]
    %v70 = vld [vmem:[%s2 + $0xd8] sm:$0xff]
    %v71 = vld [vmem:[%s2 + $0xe0] sm:$0xff]
    %v72 = vld [vmem:[%s2 + $0xe8] sm:$0xff]
    %v73 = vld [vmem:[%s2 + $0xf0] sm:$0xff]
    %v74 = vld [vmem:[%s2 + $0xf8] sm:$0xff]
    %v75 = vld [vmem:[%s3] sm:$0xf]
    %v77 = vlaneseq
    %v78 = vshrl.u32 %v77, 7
    %v79 = vsub.s32 0, %v78
    %v80 = vrot.slane %v75, %v79
    %v81 = vlaneseq
    %v82 = vshrl.u32 %v81, 7
    %v83 = vsub.s32 1, %v82
    %v84 = vrot.slane %v75, %v83
    %v85 = vlaneseq
    %v86 = vshrl.u32 %v85, 7
    %v87 = vsub.s32 2, %v86
    %v88 = vrot.slane %v75, %v87
    %v89 = vlaneseq
    %v90 = vshrl.u32 %v89, 7
    %v91 = vsub.s32 3, %v90
    %v92 = vrot.slane %v75, %v91
    %v101 = vunpack.c.l.b16 %v39
    %v102 = vunpack.c.l.b16 %v40
    %v103 = vunpack.c.l.b16 %v41
    %v104 = vunpack.c.l.b16 %v42
    %v105 = vpack.c.b16 %v102, %v101
    %v106 = vpack.c.b16 %v104, %v103
    %v141 = vunpack.c.l.b16 %v43
    %v142 = vunpack.c.h.b16 %v43
    %v143 = vunpack.c.l.b16 %v44
    %v144 = vunpack.c.h.b16 %v44
    %v145 = vunpack.c.l.b16 %v45
    %v146 = vunpack.c.h.b16 %v45
    %v147 = vunpack.c.l.b16 %v46
    %v148 = vunpack.c.h.b16 %v46
    %v149 = vunpack.c.l.b16 %v47
    %v150 = vunpack.c.h.b16 %v47
    %v151 = vunpack.c.l.b16 %v48
    %v152 = vunpack.c.h.b16 %v48
    %v153 = vunpack.c.l.b16 %v49
    %v154 = vunpack.c.h.b16 %v49
    %v155 = vunpack.c.l.b16 %v50
    %v156 = vunpack.c.h.b16 %v50
    %v157 = vunpack.c.l.b16 %v51
    %v158 = vunpack.c.h.b16 %v51
    %v159 = vunpack.c.l.b16 %v52
    %v160 = vunpack.c.h.b16 %v52
    %v161 = vunpack.c.l.b16 %v53
    %v162 = vunpack.c.h.b16 %v53
    %v163 = vunpack.c.l.b16 %v54
    %v164 = vunpack.c.h.b16 %v54
    %v165 = vunpack.c.l.b16 %v55
    %v166 = vunpack.c.h.b16 %v55
    %v167 = vunpack.c.l.b16 %v56
    %v168 = vunpack.c.h.b16 %v56
    %v169 = vunpack.c.l.b16 %v57
    %v170 = vunpack.c.h.b16 %v57
    %v171 = vunpack.c.l.b16 %v58
    %v172 = vunpack.c.h.b16 %v58
    %v173 = vunpack.c.l.b16 %v59
    %v174 = vunpack.c.h.b16 %v59
    %v175 = vunpack.c.l.b16 %v60
    %v176 = vunpack.c.h.b16 %v60
    %v177 = vunpack.c.l.b16 %v61
    %v178 = vunpack.c.h.b16 %v61
    %v179 = vunpack.c.l.b16 %v62
    %v180 = vunpack.c.h.b16 %v62
    %v181 = vunpack.c.l.b16 %v63
    %v182 = vunpack.c.h.b16 %v63
    %v183 = vunpack.c.l.b16 %v64
    %v184 = vunpack.c.h.b16 %v64
    %v185 = vunpack.c.l.b16 %v65
    %v186 = vunpack.c.h.b16 %v65
    %v187 = vunpack.c.l.b16 %v66
    %v188 = vunpack.c.h.b16 %v66
    %v189 = vunpack.c.l.b16 %v67
    %v190 = vunpack.c.h.b16 %v67
    %v191 = vunpack.c.l.b16 %v68
    %v192 = vunpack.c.h.b16 %v68
    %v193 = vunpack.c.l.b16 %v69
    %v194 = vunpack.c.h.b16 %v69
    %v195 = vunpack.c.l.b16 %v70
    %v196 = vunpack.c.h.b16 %v70
    %v197 = vunpack.c.l.b16 %v71
    %v198 = vunpack.c.h.b16 %v71
    %v199 = vunpack.c.l.b16 %v72
    %v200 = vunpack.c.h.b16 %v72
    %v201 = vunpack.c.l.b16 %v73
    %v202 = vunpack.c.h.b16 %v73
    %v203 = vunpack.c.l.b16 %v74
    %v204 = vunpack.c.h.b16 %v74
    %v205 = vpack.c.b16 %v145, %v141
    %v206 = vpack.c.b16 %v146, %v142
    %v207 = vpack.c.b16 %v147, %v143
    %v208 = vpack.c.b16 %v148, %v144
    %v209 = vpack.c.b16 %v153, %v149
    %v210 = vpack.c.b16 %v154, %v150
    %v211 = vpack.c.b16 %v155, %v151
    %v212 = vpack.c.b16 %v156, %v152
    %v213 = vpack.c.b16 %v161, %v157
    %v214 = vpack.c.b16 %v162, %v158
    %v215 = vpack.c.b16 %v163, %v159
    %v216 = vpack.c.b16 %v164, %v160
    %v217 = vpack.c.b16 %v169, %v165
    %v218 = vpack.c.b16 %v170, %v166
    %v219 = vpack.c.b16 %v171, %v167
    %v220 = vpack.c.b16 %v172, %v168
    %v221 = vpack.c.b16 %v177, %v173
    %v222 = vpack.c.b16 %v178, %v174
    %v223 = vpack.c.b16 %v179, %v175
    %v224 = vpack.c.b16 %v180, %v176
    %v225 = vpack.c.b16 %v185, %v181
    %v226 = vpack.c.b16 %v186, %v182
    %v227 = vpack.c.b16 %v187, %v183
    %v228 = vpack.c.b16 %v188, %v184
    %v229 = vpack.c.b16 %v193, %v189
    %v230 = vpack.c.b16 %v194, %v190
    %v231 = vpack.c.b16 %v195, %v191
    %v232 = vpack.c.b16 %v196, %v192
    %v233 = vpack.c.b16 %v201, %v197
    %v234 = vpack.c.b16 %v202, %v198
    %v235 = vpack.c.b16 %v203, %v199
    %v236 = vpack.c.b16 %v204, %v200
    %269 = vmatprep.subr.bf16.mxu0 %v206
    %270 = vmatpush1.bf16.msra.mxu0 %v205
    %271 = vmatprep.subr.bf16.mxu0 %v210
    %272 = vmatpush1.bf16.msra.mxu0 %v209
    %273 = vmatprep.subr.bf16.mxu0 %v214
    %274 = vmatpush1.bf16.msra.mxu0 %v213
    %275 = vmatprep.subr.bf16.mxu0 %v218
    %276 = vmatpush1.bf16.msra.mxu0 %v217
    %277 = vmatprep.subr.bf16.mxu0 %v222
    %278 = vmatpush1.bf16.msra.mxu0 %v221
    %279 = vmatprep.subr.bf16.mxu0 %v226
    %280 = vmatpush1.bf16.msra.mxu0 %v225
    %281 = vmatprep.subr.bf16.mxu0 %v230
    %282 = vmatpush1.bf16.msra.mxu0 %v229
    %283 = vmatprep.subr.bf16.mxu0 %v234
    %284 = vmatpush1.bf16.msra.mxu0 %v233
    %285 = vmatprep.subr.bf16.mxu0 0
    %286 = vmatpush1.bf16.msra.mxu0 0
    %287 = vmatprep.subr.bf16.mxu0 0
    %288 = vmatpush1.bf16.msra.mxu0 0
    %289 = vmatprep.subr.bf16.mxu0 0
    %290 = vmatpush1.bf16.msra.mxu0 0
    %291 = vmatprep.subr.bf16.mxu0 0
    %292 = vmatpush1.bf16.msra.mxu0 0
    %293 = vmatprep.subr.bf16.mxu0 0
    %294 = vmatpush1.bf16.msra.mxu0 0
    %295 = vmatprep.subr.bf16.mxu0 0
    %296 = vmatpush1.bf16.msra.mxu0 0
    %297 = vmatprep.subr.bf16.mxu0 0
    %298 = vmatpush1.bf16.msra.mxu0 0
    %299 = vmatprep.subr.bf16.mxu0 0
    %300 = vmatpush1.bf16.msra.mxu0 0
    %301 = vmatprep.mubr.bf16.mxu0 0
    %302 = vmatmul.mubr.bf16.gmra.mrb[0].mxu0 %v105
    %v303 = vpop.f32.mrb[0].mxu0
    %v304 = vadd.f32 %v80, %v303
    %v305 = vpop.f32.mrb[0].mxu0
    %v306 = vadd.f32 %v84, %v305
    %v307 = vpop.f32.mrb[0].mxu0
    %v308 = vadd.f32 %v80, %v307
    %v309 = vpop.f32.mrb[0].mxu0
    %v310 = vadd.f32 %v84, %v309
    %311 = vmatprep.mubr.bf16.mxu0 0
    %312 = vmatmul.mubr.bf16.gmra.mrb[0].mxu0 %v106
    %v313 = vpop.f32.mrb[0].mxu0
    %v314 = vadd.f32 %v80, %v313
    %v315 = vpop.f32.mrb[0].mxu0
    %v316 = vadd.f32 %v84, %v315
    %v317 = vpop.f32.mrb[0].mxu0
    %v318 = vadd.f32 %v80, %v317
    %v319 = vpop.f32.mrb[0].mxu0
    %v320 = vadd.f32 %v84, %v319
    %321 = vdwg.mxu0
    %322 = vmatprep.subr.bf16.mxu0 %v208
    %323 = vmatpush1.bf16.msra.mxu0 %v207
    %324 = vmatprep.subr.bf16.mxu0 %v212
    %325 = vmatpush1.bf16.msra.mxu0 %v211
    %326 = vmatprep.subr.bf16.mxu0 %v216
    %327 = vmatpush1.bf16.msra.mxu0 %v215
    %328 = vmatprep.subr.bf16.mxu0 %v220
    %329 = vmatpush1.bf16.msra.mxu0 %v219
    %330 = vmatprep.subr.bf16.mxu0 %v224
    %331 = vmatpush1.bf16.msra.mxu0 %v223
    %332 = vmatprep.subr.bf16.mxu0 %v228
    %333 = vmatpush1.bf16.msra.mxu0 %v227
    %334 = vmatprep.subr.bf16.mxu0 %v232
    %335 = vmatpush1.bf16.msra.mxu0 %v231
    %336 = vmatprep.subr.bf16.mxu0 %v236
    %337 = vmatpush1.bf16.msra.mxu0 %v235
    %338 = vmatprep.subr.bf16.mxu0 0
    %339 = vmatpush1.bf16.msra.mxu0 0
    %340 = vmatprep.subr.bf16.mxu0 0
    %341 = vmatpush1.bf16.msra.mxu0 0
    %342 = vmatprep.subr.bf16.mxu0 0
    %343 = vmatpush1.bf16.msra.mxu0 0
    %344 = vmatprep.subr.bf16.mxu0 0
    %345 = vmatpush1.bf16.msra.mxu0 0
    %346 = vmatprep.subr.bf16.mxu0 0
    %347 = vmatpush1.bf16.msra.mxu0 0
    %348 = vmatprep.subr.bf16.mxu0 0
    %349 = vmatpush1.bf16.msra.mxu0 0
    %350 = vmatprep.subr.bf16.mxu0 0
    %351 = vmatpush1.bf16.msra.mxu0 0
    %352 = vmatprep.subr.bf16.mxu0 0
    %353 = vmatpush1.bf16.msra.mxu0 0
    %354 = vmatprep.mubr.bf16.mxu0 0
    %355 = vmatmul.mubr.bf16.gmra.mrb[0].mxu0 %v105
    %v356 = vpop.f32.mrb[0].mxu0
    %v357 = vadd.f32 %v88, %v356
    %v358 = vpop.f32.mrb[0].mxu0
    %v359 = vadd.f32 %v92, %v358
    %v360 = vpop.f32.mrb[0].mxu0
    %v361 = vadd.f32 %v88, %v360
    %v362 = vpop.f32.mrb[0].mxu0
    %v363 = vadd.f32 %v92, %v362
    %364 = vmatprep.mubr.bf16.mxu0 0
    %365 = vmatmul.mubr.bf16.gmra.mrb[0].mxu0 %v106
    %v366 = vpop.f32.mrb[0].mxu0
    %v367 = vadd.f32 %v88, %v366
    %v368 = vpop.f32.mrb[0].mxu0
    %v369 = vadd.f32 %v92, %v368
    %v370 = vpop.f32.mrb[0].mxu0
    %v371 = vadd.f32 %v88, %v370
    %v372 = vpop.f32.mrb[0].mxu0
    %v373 = vadd.f32 %v92, %v372
    %374 = vdwg.mxu0
    %v375 = vmax.f32 %v304, 0.0
    %v376 = vmax.f32 %v306, 0.0
    %v377 = vmax.f32 %v357, 0.0
    %v378 = vmax.f32 %v359, 0.0
    %v379 = vmax.f32 %v308, 0.0
    %v380 = vmax.f32 %v310, 0.0
    %v381 = vmax.f32 %v361, 0.0
    %v382 = vmax.f32 %v363, 0.0
    %v383 = vmax.f32 %v314, 0.0
    %v384 = vmax.f32 %v316, 0.0
    %v385 = vmax.f32 %v367, 0.0
    %v386 = vmax.f32 %v369, 0.0
    %v387 = vmax.f32 %v318, 0.0
    %v388 = vmax.f32 %v320, 0.0
    %v389 = vmax.f32 %v371, 0.0
    %v390 = vmax.f32 %v373, 0.0
    %v391 = vpack.c.bf16 %v379, %v375
    %v392 = vpack.c.bf16 %v380, %v376
    %v393 = vpack.c.bf16 %v381, %v377
    %v394 = vpack.c.bf16 %v382, %v378
    %v395 = vpack.c.bf16 %v387, %v383
    %v396 = vpack.c.bf16 %v388, %v384
    %v397 = vpack.c.bf16 %v389, %v385
    %v398 = vpack.c.bf16 %v390, %v386
    %v399 = vld [vmem:[%s4] sm:$0xf]
    %v400 = vld [vmem:[%s4 + $0x4] sm:$0xf]
    %v401 = vld [vmem:[%s4 + $0x8] sm:$0xf]
    %v402 = vld [vmem:[%s4 + $0xc] sm:$0xf]
    %v403 = vld [vmem:[%s4 + $0x10] sm:$0xf]
    %v404 = vld [vmem:[%s4 + $0x14] sm:$0xf]
    %v405 = vld [vmem:[%s4 + $0x18] sm:$0xf]
    %v406 = vld [vmem:[%s4 + $0x1c] sm:$0xf]
    %v407 = vld [vmem:[%s4 + $0x20] sm:$0xf]
    %v408 = vld [vmem:[%s4 + $0x24] sm:$0xf]
    %v409 = vld [vmem:[%s4 + $0x28] sm:$0xf]
    %v410 = vld [vmem:[%s4 + $0x2c] sm:$0xf]
    %v411 = vld [vmem:[%s4 + $0x30] sm:$0xf]
    %v412 = vld [vmem:[%s4 + $0x34] sm:$0xf]
    %v413 = vld [vmem:[%s4 + $0x38] sm:$0xf]
    %v414 = vld [vmem:[%s4 + $0x3c] sm:$0xf]
    %v415 = vld [vmem:[%s4 + $0x40] sm:$0xf]
    %v416 = vld [vmem:[%s4 + $0x44] sm:$0xf]
    %v417 = vld [vmem:[%s4 + $0x48] sm:$0xf]
    %v418 = vld [vmem:[%s4 + $0x4c] sm:$0xf]
    %v419 = vld [vmem:[%s4 + $0x50] sm:$0xf]
    %v420 = vld [vmem:[%s4 + $0x54] sm:$0xf]
    %v421 = vld [vmem:[%s4 + $0x58] sm:$0xf]
    %v422 = vld [vmem:[%s4 + $0x5c] sm:$0xf]
    %v423 = vld [vmem:[%s4 + $0x60] sm:$0xf]
    %v424 = vld [vmem:[%s4 + $0x64] sm:$0xf]
    %v425 = vld [vmem:[%s4 + $0x68] sm:$0xf]
    %v426 = vld [vmem:[%s4 + $0x6c] sm:$0xf]
    %v427 = vld [vmem:[%s4 + $0x70] sm:$0xf]
    %v428 = vld [vmem:[%s4 + $0x74] sm:$0xf]
    %v429 = vld [vmem:[%s4 + $0x78] sm:$0xf]
    %v430 = vld [vmem:[%s4 + $0x7c] sm:$0xf]
    %v431 = vld [vmem:[%s4 + $0x80] sm:$0xf]
    %v432 = vld [vmem:[%s4 + $0x84] sm:$0xf]
    %v433 = vld [vmem:[%s4 + $0x88] sm:$0xf]
    %v434 = vld [vmem:[%s4 + $0x8c] sm:$0xf]
    %v435 = vld [vmem:[%s4 + $0x90] sm:$0xf]
    %v436 = vld [vmem:[%s4 + $0x94] sm:$0xf]
    %v437 = vld [vmem:[%s4 + $0x98] sm:$0xf]
    %v438 = vld [vmem:[%s4 + $0x9c] sm:$0xf]
    %v439 = vld [vmem:[%s4 + $0xa0] sm:$0xf]
    %v440 = vld [vmem:[%s4 + $0xa4] sm:$0xf]
    %v441 = vld [vmem:[%s4 + $0xa8] sm:$0xf]
    %v442 = vld [vmem:[%s4 + $0xac] sm:$0xf]
    %v443 = vld [vmem:[%s4 + $0xb0] sm:$0xf]
    %v444 = vld [vmem:[%s4 + $0xb4] sm:$0xf]
    %v445 = vld [vmem:[%s4 + $0xb8] sm:$0xf]
    %v446 = vld [vmem:[%s4 + $0xbc] sm:$0xf]
    %v447 = vld [vmem:[%s4 + $0xc0] sm:$0xf]
    %v448 = vld [vmem:[%s4 + $0xc4] sm:$0xf]
    %v449 = vld [vmem:[%s4 + $0xc8] sm:$0xf]
    %v450 = vld [vmem:[%s4 + $0xcc] sm:$0xf]
    %v451 = vld [vmem:[%s4 + $0xd0] sm:$0xf]
    %v452 = vld [vmem:[%s4 + $0xd4] sm:$0xf]
    %v453 = vld [vmem:[%s4 + $0xd8] sm:$0xf]
    %v454 = vld [vmem:[%s4 + $0xdc] sm:$0xf]
    %v455 = vld [vmem:[%s4 + $0xe0] sm:$0xf]
    %v456 = vld [vmem:[%s4 + $0xe4] sm:$0xf]
    %v457 = vld [vmem:[%s4 + $0xe8] sm:$0xf]
    %v458 = vld [vmem:[%s4 + $0xec] sm:$0xf]
    %v459 = vld [vmem:[%s4 + $0xf0] sm:$0xf]
    %v460 = vld [vmem:[%s4 + $0xf4] sm:$0xf]
    %v461 = vld [vmem:[%s4 + $0xf8] sm:$0xf]
    %v462 = vld [vmem:[%s4 + $0xfc] sm:$0xf]
    %v463 = vld [vmem:[%s5] sm:$0x1]
    %v465 = vlaneseq
    %v466 = vshrl.u32 %v465, 7
    %v467 = vsub.s32 0, %v466
    %v468 = vrot.slane %v463, %v467
    %v534 = vunpack.c.l.b16 %v399
    %v535 = vunpack.c.l.b16 %v400
    %v536 = vunpack.c.l.b16 %v401
    %v537 = vunpack.c.l.b16 %v402
    %v538 = vunpack.c.l.b16 %v403
    %v539 = vunpack.c.l.b16 %v404
    %v540 = vunpack.c.l.b16 %v405
    %v541 = vunpack.c.l.b16 %v406
    %v542 = vunpack.c.l.b16 %v407
    %v543 = vunpack.c.l.b16 %v408
    %v544 = vunpack.c.l.b16 %v409
    %v545 = vunpack.c.l.b16 %v410
    %v546 = vunpack.c.l.b16 %v411
    %v547 = vunpack.c.l.b16 %v412
    %v548 = vunpack.c.l.b16 %v413
    %v549 = vunpack.c.l.b16 %v414
    %v550 = vunpack.c.l.b16 %v415
    %v551 = vunpack.c.l.b16 %v416
    %v552 = vunpack.c.l.b16 %v417
    %v553 = vunpack.c.l.b16 %v418
    %v554 = vunpack.c.l.b16 %v419
    %v555 = vunpack.c.l.b16 %v420
    %v556 = vunpack.c.l.b16 %v421
    %v557 = vunpack.c.l.b16 %v422
    %v558 = vunpack.c.l.b16 %v423
    %v559 = vunpack.c.l.b16 %v424
    %v560 = vunpack.c.l.b16 %v425
    %v561 = vunpack.c.l.b16 %v426
    %v562 = vunpack.c.l.b16 %v427
    %v563 = vunpack.c.l.b16 %v428
    %v564 = vunpack.c.l.b16 %v429
    %v565 = vunpack.c.l.b16 %v430
    %v566 = vunpack.c.l.b16 %v431
    %v567 = vunpack.c.l.b16 %v432
    %v568 = vunpack.c.l.b16 %v433
    %v569 = vunpack.c.l.b16 %v434
    %v570 = vunpack.c.l.b16 %v435
    %v571 = vunpack.c.l.b16 %v436
    %v572 = vunpack.c.l.b16 %v437
    %v573 = vunpack.c.l.b16 %v438
    %v574 = vunpack.c.l.b16 %v439
    %v575 = vunpack.c.l.b16 %v440
    %v576 = vunpack.c.l.b16 %v441
    %v577 = vunpack.c.l.b16 %v442
    %v578 = vunpack.c.l.b16 %v443
    %v579 = vunpack.c.l.b16 %v444
    %v580 = vunpack.c.l.b16 %v445
    %v581 = vunpack.c.l.b16 %v446
    %v582 = vunpack.c.l.b16 %v447
    %v583 = vunpack.c.l.b16 %v448
    %v584 = vunpack.c.l.b16 %v449
    %v585 = vunpack.c.l.b16 %v450
    %v586 = vunpack.c.l.b16 %v451
    %v587 = vunpack.c.l.b16 %v452
    %v588 = vunpack.c.l.b16 %v453
    %v589 = vunpack.c.l.b16 %v454
    %v590 = vunpack.c.l.b16 %v455
    %v591 = vunpack.c.l.b16 %v456
    %v592 = vunpack.c.l.b16 %v457
    %v593 = vunpack.c.l.b16 %v458
    %v594 = vunpack.c.l.b16 %v459
    %v595 = vunpack.c.l.b16 %v460
    %v596 = vunpack.c.l.b16 %v461
    %v597 = vunpack.c.l.b16 %v462
    %v598 = vpack.c.b16 %v535, %v534
    %v599 = vpack.c.b16 %v537, %v536
    %v600 = vpack.c.b16 %v539, %v538
    %v601 = vpack.c.b16 %v541, %v540
    %v602 = vpack.c.b16 %v543, %v542
    %v603 = vpack.c.b16 %v545, %v544
    %v604 = vpack.c.b16 %v547, %v546
    %v605 = vpack.c.b16 %v549, %v548
    %v606 = vpack.c.b16 %v551, %v550
    %v607 = vpack.c.b16 %v553, %v552
    %v608 = vpack.c.b16 %v555, %v554
    %v609 = vpack.c.b16 %v557, %v556
    %v610 = vpack.c.b16 %v559, %v558
    %v611 = vpack.c.b16 %v561, %v560
    %v612 = vpack.c.b16 %v563, %v562
    %v613 = vpack.c.b16 %v565, %v564
    %v614 = vpack.c.b16 %v567, %v566
    %v615 = vpack.c.b16 %v569, %v568
    %v616 = vpack.c.b16 %v571, %v570
    %v617 = vpack.c.b16 %v573, %v572
    %v618 = vpack.c.b16 %v575, %v574
    %v619 = vpack.c.b16 %v577, %v576
    %v620 = vpack.c.b16 %v579, %v578
    %v621 = vpack.c.b16 %v581, %v580
    %v622 = vpack.c.b16 %v583, %v582
    %v623 = vpack.c.b16 %v585, %v584
    %v624 = vpack.c.b16 %v587, %v586
    %v625 = vpack.c.b16 %v589, %v588
    %v626 = vpack.c.b16 %v591, %v590
    %v627 = vpack.c.b16 %v593, %v592
    %v628 = vpack.c.b16 %v595, %v594
    %v629 = vpack.c.b16 %v597, %v596
    %662 = vmatprep.subr.bf16.mxu0 0
    %663 = vmatpush1.bf16.msra.mxu0 %v598
    %664 = vmatprep.subr.bf16.mxu0 0
    %665 = vmatpush1.bf16.msra.mxu0 %v599
    %666 = vmatprep.subr.bf16.mxu0 0
    %667 = vmatpush1.bf16.msra.mxu0 %v600
    %668 = vmatprep.subr.bf16.mxu0 0
    %669 = vmatpush1.bf16.msra.mxu0 %v601
    %670 = vmatprep.subr.bf16.mxu0 0
    %671 = vmatpush1.bf16.msra.mxu0 %v602
    %672 = vmatprep.subr.bf16.mxu0 0
    %673 = vmatpush1.bf16.msra.mxu0 %v603
    %674 = vmatprep.subr.bf16.mxu0 0
    %675 = vmatpush1.bf16.msra.mxu0 %v604
    %676 = vmatprep.subr.bf16.mxu0 0
    %677 = vmatpush1.bf16.msra.mxu0 %v605
    %678 = vmatprep.subr.bf16.mxu0 0
    %679 = vmatpush1.bf16.msra.mxu0 %v606
    %680 = vmatprep.subr.bf16.mxu0 0
    %681 = vmatpush1.bf16.msra.mxu0 %v607
    %682 = vmatprep.subr.bf16.mxu0 0
    %683 = vmatpush1.bf16.msra.mxu0 %v608
    %684 = vmatprep.subr.bf16.mxu0 0
    %685 = vmatpush1.bf16.msra.mxu0 %v609
    %686 = vmatprep.subr.bf16.mxu0 0
    %687 = vmatpush1.bf16.msra.mxu0 %v610
    %688 = vmatprep.subr.bf16.mxu0 0
    %689 = vmatpush1.bf16.msra.mxu0 %v611
    %690 = vmatprep.subr.bf16.mxu0 0
    %691 = vmatpush1.bf16.msra.mxu0 %v612
    %692 = vmatprep.subr.bf16.mxu0 0
    %693 = vmatpush1.bf16.msra.mxu0 %v613
    %694 = vmatprep.mubr.bf16.mxu0 %v392
    %695 = vmatmul.mubr.bf16.gmra.mrb[0].mxu0 %v391
    %v696 = vpop.f32.mrb[0].mxu0
    %v697 = vadd.f32 %v468, %v696
    %v698 = vpop.f32.mrb[0].mxu0
    %v699 = vpop.f32.mrb[0].mxu0
    %v700 = vadd.f32 %v468, %v699
    %v701 = vpop.f32.mrb[0].mxu0
    %702 = vmatprep.mubr.bf16.mxu0 %v396
    %703 = vmatmul.mubr.bf16.gmra.mrb[0].mxu0 %v395
    %v704 = vpop.f32.mrb[0].mxu0
    %v705 = vadd.f32 %v468, %v704
    %v706 = vpop.f32.mrb[0].mxu0
    %v707 = vpop.f32.mrb[0].mxu0
    %v708 = vadd.f32 %v468, %v707
    %v709 = vpop.f32.mrb[0].mxu0
    %710 = vdwg.mxu0
    %711 = vmatprep.subr.bf16.mxu0 0
    %712 = vmatpush1.bf16.msra.mxu0 %v614
    %713 = vmatprep.subr.bf16.mxu0 0
    %714 = vmatpush1.bf16.msra.mxu0 %v615
    %715 = vmatprep.subr.bf16.mxu0 0
    %716 = vmatpush1.bf16.msra.mxu0 %v616
    %717 = vmatprep.subr.bf16.mxu0 0
    %718 = vmatpush1.bf16.msra.mxu0 %v617
    %719 = vmatprep.subr.bf16.mxu0 0
    %720 = vmatpush1.bf16.msra.mxu0 %v618
    %721 = vmatprep.subr.bf16.mxu0 0
    %722 = vmatpush1.bf16.msra.mxu0 %v619
    %723 = vmatprep.subr.bf16.mxu0 0
    %724 = vmatpush1.bf16.msra.mxu0 %v620
    %725 = vmatprep.subr.bf16.mxu0 0
    %726 = vmatpush1.bf16.msra.mxu0 %v621
    %727 = vmatprep.subr.bf16.mxu0 0
    %728 = vmatpush1.bf16.msra.mxu0 %v622
    %729 = vmatprep.subr.bf16.mxu0 0
    %730 = vmatpush1.bf16.msra.mxu0 %v623
    %731 = vmatprep.subr.bf16.mxu0 0
    %732 = vmatpush1.bf16.msra.mxu0 %v624
    %733 = vmatprep.subr.bf16.mxu0 0
    %734 = vmatpush1.bf16.msra.mxu0 %v625
    %735 = vmatprep.subr.bf16.mxu0 0
    %736 = vmatpush1.bf16.msra.mxu0 %v626
    %737 = vmatprep.subr.bf16.mxu0 0
    %738 = vmatpush1.bf16.msra.mxu0 %v627
    %739 = vmatprep.subr.bf16.mxu0 0
    %740 = vmatpush1.bf16.msra.mxu0 %v628
    %741 = vmatprep.subr.bf16.mxu0 0
    %742 = vmatpush1.bf16.msra.mxu0 %v629
    %743 = vmatprep.mubr.bf16.mxu0 %v394
    %744 = vmatmul.mubr.bf16.gmra.mrb[0].mxu0 %v393
    %v745 = vpop.f32.mrb[0].mxu0
    %v746 = vadd.f32 %v697, %v745
    %v747 = vpop.f32.mrb[0].mxu0
    %v748 = vpop.f32.mrb[0].mxu0
    %v749 = vadd.f32 %v700, %v748
    %v750 = vpop.f32.mrb[0].mxu0
    %751 = vmatprep.mubr.bf16.mxu0 %v398
    %752 = vmatmul.mubr.bf16.gmra.mrb[0].mxu0 %v397
    %v753 = vpop.f32.mrb[0].mxu0
    %v754 = vadd.f32 %v705, %v753
    %v755 = vpop.f32.mrb[0].mxu0
    %v756 = vpop.f32.mrb[0].mxu0
    %v757 = vadd.f32 %v708, %v756
    %v758 = vpop.f32.mrb[0].mxu0
    %759 = vdwg.mxu0
    %v760 = vmax.f32 %v746, 0.0
    %v761 = vmax.f32 %v749, 0.0
    %v762 = vmax.f32 %v754, 0.0
    %v763 = vmax.f32 %v757, 0.0
    %v764 = vpack.c.bf16 %v761, %v760
    %v765 = vpack.c.bf16 %v763, %v762
    %v766 = vld [vmem:[%s6] sm:$0xff]
    %v767 = vld [vmem:[%s6 + $0x8] sm:$0xff]
    %v768 = vld [vmem:[%s6 + $0x10] sm:$0xff]
    %v769 = vld [vmem:[%s6 + $0x18] sm:$0xff]
    %v770 = vld [vmem:[%s6 + $0x20] sm:$0xff]
    %v771 = vld [vmem:[%s6 + $0x28] sm:$0xff]
    %v772 = vld [vmem:[%s6 + $0x30] sm:$0xff]
    %v773 = vld [vmem:[%s6 + $0x38] sm:$0xff]
    %v774 = vld [vmem:[%s6 + $0x40] sm:$0xff]
    %v775 = vld [vmem:[%s6 + $0x48] sm:$0xff]
    %v776 = vld [vmem:[%s6 + $0x50] sm:$0xff]
    %v777 = vld [vmem:[%s6 + $0x58] sm:$0xff]
    %v778 = vld [vmem:[%s6 + $0x60] sm:$0xff]
    %v779 = vld [vmem:[%s6 + $0x68] sm:$0xff]
    %v780 = vld [vmem:[%s6 + $0x70] sm:$0xff]
    %v781 = vld [vmem:[%s6 + $0x78] sm:$0xff]
    %v782 = vld [vmem:[%s6 + $0x80] sm:$0xff]
    %v783 = vld [vmem:[%s6 + $0x88] sm:$0xff]
    %v784 = vld [vmem:[%s6 + $0x90] sm:$0xff]
    %v785 = vld [vmem:[%s6 + $0x98] sm:$0xff]
    %v786 = vld [vmem:[%s6 + $0xa0] sm:$0xff]
    %v787 = vld [vmem:[%s6 + $0xa8] sm:$0xff]
    %v788 = vld [vmem:[%s6 + $0xb0] sm:$0xff]
    %v789 = vld [vmem:[%s6 + $0xb8] sm:$0xff]
    %v790 = vld [vmem:[%s6 + $0xc0] sm:$0xff]
    %v791 = vld [vmem:[%s6 + $0xc8] sm:$0xff]
    %v792 = vld [vmem:[%s6 + $0xd0] sm:$0xff]
    %v793 = vld [vmem:[%s6 + $0xd8] sm:$0xff]
    %v794 = vld [vmem:[%s6 + $0xe0] sm:$0xff]
    %v795 = vld [vmem:[%s6 + $0xe8] sm:$0xff]
    %v796 = vld [vmem:[%s6 + $0xf0] sm:$0xff]
    %v797 = vld [vmem:[%s6 + $0xf8] sm:$0xff]
    %v798 = vld [vmem:[%s7] sm:$0xf]
    %v800 = vlaneseq
    %v801 = vshrl.u32 %v800, 7
    %v802 = vsub.s32 0, %v801
    %v803 = vrot.slane %v798, %v802
    %v804 = vlaneseq
    %v805 = vshrl.u32 %v804, 7
    %v806 = vsub.s32 1, %v805
    %v807 = vrot.slane %v798, %v806
    %v808 = vlaneseq
    %v809 = vshrl.u32 %v808, 7
    %v810 = vsub.s32 2, %v809
    %v811 = vrot.slane %v798, %v810
    %v812 = vlaneseq
    %v813 = vshrl.u32 %v812, 7
    %v814 = vsub.s32 3, %v813
    %v815 = vrot.slane %v798, %v814
    %v852 = vunpack.c.l.b16 %v766
    %v853 = vunpack.c.h.b16 %v766
    %v854 = vunpack.c.l.b16 %v767
    %v855 = vunpack.c.h.b16 %v767
    %v856 = vunpack.c.l.b16 %v768
    %v857 = vunpack.c.h.b16 %v768
    %v858 = vunpack.c.l.b16 %v769
    %v859 = vunpack.c.h.b16 %v769
    %v860 = vunpack.c.l.b16 %v770
    %v861 = vunpack.c.h.b16 %v770
    %v862 = vunpack.c.l.b16 %v771
    %v863 = vunpack.c.h.b16 %v771
    %v864 = vunpack.c.l.b16 %v772
    %v865 = vunpack.c.h.b16 %v772
    %v866 = vunpack.c.l.b16 %v773
    %v867 = vunpack.c.h.b16 %v773
    %v868 = vunpack.c.l.b16 %v774
    %v869 = vunpack.c.h.b16 %v774
    %v870 = vunpack.c.l.b16 %v775
    %v871 = vunpack.c.h.b16 %v775
    %v872 = vunpack.c.l.b16 %v776
    %v873 = vunpack.c.h.b16 %v776
    %v874 = vunpack.c.l.b16 %v777
    %v875 = vunpack.c.h.b16 %v777
    %v876 = vunpack.c.l.b16 %v778
    %v877 = vunpack.c.h.b16 %v778
    %v878 = vunpack.c.l.b16 %v779
    %v879 = vunpack.c.h.b16 %v779
    %v880 = vunpack.c.l.b16 %v780
    %v881 = vunpack.c.h.b16 %v780
    %v882 = vunpack.c.l.b16 %v781
    %v883 = vunpack.c.h.b16 %v781
    %v884 = vunpack.c.l.b16 %v782
    %v885 = vunpack.c.h.b16 %v782
    %v886 = vunpack.c.l.b16 %v783
    %v887 = vunpack.c.h.b16 %v783
    %v888 = vunpack.c.l.b16 %v784
    %v889 = vunpack.c.h.b16 %v784
    %v890 = vunpack.c.l.b16 %v785
    %v891 = vunpack.c.h.b16 %v785
    %v892 = vunpack.c.l.b16 %v786
    %v893 = vunpack.c.h.b16 %v786
    %v894 = vunpack.c.l.b16 %v787
    %v895 = vunpack.c.h.b16 %v787
    %v896 = vunpack.c.l.b16 %v788
    %v897 = vunpack.c.h.b16 %v788
    %v898 = vunpack.c.l.b16 %v789
    %v899 = vunpack.c.h.b16 %v789
    %v900 = vunpack.c.l.b16 %v790
    %v901 = vunpack.c.h.b16 %v790
    %v902 = vunpack.c.l.b16 %v791
    %v903 = vunpack.c.h.b16 %v791
    %v904 = vunpack.c.l.b16 %v792
    %v905 = vunpack.c.h.b16 %v792
    %v906 = vunpack.c.l.b16 %v793
    %v907 = vunpack.c.h.b16 %v793
    %v908 = vunpack.c.l.b16 %v794
    %v909 = vunpack.c.h.b16 %v794
    %v910 = vunpack.c.l.b16 %v795
    %v911 = vunpack.c.h.b16 %v795
    %v912 = vunpack.c.l.b16 %v796
    %v913 = vunpack.c.h.b16 %v796
    %v914 = vunpack.c.l.b16 %v797
    %v915 = vunpack.c.h.b16 %v797
    %v916 = vpack.c.b16 %v856, %v852
    %v917 = vpack.c.b16 %v857, %v853
    %v918 = vpack.c.b16 %v858, %v854
    %v919 = vpack.c.b16 %v859, %v855
    %v920 = vpack.c.b16 %v864, %v860
    %v921 = vpack.c.b16 %v865, %v861
    %v922 = vpack.c.b16 %v866, %v862
    %v923 = vpack.c.b16 %v867, %v863
    %v924 = vpack.c.b16 %v872, %v868
    %v925 = vpack.c.b16 %v873, %v869
    %v926 = vpack.c.b16 %v874, %v870
    %v927 = vpack.c.b16 %v875, %v871
    %v928 = vpack.c.b16 %v880, %v876
    %v929 = vpack.c.b16 %v881, %v877
    %v930 = vpack.c.b16 %v882, %v878
    %v931 = vpack.c.b16 %v883, %v879
    %v932 = vpack.c.b16 %v888, %v884
    %v933 = vpack.c.b16 %v889, %v885
    %v934 = vpack.c.b16 %v890, %v886
    %v935 = vpack.c.b16 %v891, %v887
    %v936 = vpack.c.b16 %v896, %v892
    %v937 = vpack.c.b16 %v897, %v893
    %v938 = vpack.c.b16 %v898, %v894
    %v939 = vpack.c.b16 %v899, %v895
    %v940 = vpack.c.b16 %v904, %v900
    %v941 = vpack.c.b16 %v905, %v901
    %v942 = vpack.c.b16 %v906, %v902
    %v943 = vpack.c.b16 %v907, %v903
    %v944 = vpack.c.b16 %v912, %v908
    %v945 = vpack.c.b16 %v913, %v909
    %v946 = vpack.c.b16 %v914, %v910
    %v947 = vpack.c.b16 %v915, %v911
    %980 = vmatprep.subr.bf16.mxu0 %v917
    %981 = vmatpush1.bf16.msra.mxu0 %v916
    %982 = vmatprep.subr.bf16.mxu0 %v921
    %983 = vmatpush1.bf16.msra.mxu0 %v920
    %984 = vmatprep.subr.bf16.mxu0 %v925
    %985 = vmatpush1.bf16.msra.mxu0 %v924
    %986 = vmatprep.subr.bf16.mxu0 %v929
    %987 = vmatpush1.bf16.msra.mxu0 %v928
    %988 = vmatprep.subr.bf16.mxu0 %v933
    %989 = vmatpush1.bf16.msra.mxu0 %v932
    %990 = vmatprep.subr.bf16.mxu0 %v937
    %991 = vmatpush1.bf16.msra.mxu0 %v936
    %992 = vmatprep.subr.bf16.mxu0 %v941
    %993 = vmatpush1.bf16.msra.mxu0 %v940
    %994 = vmatprep.subr.bf16.mxu0 %v945
    %995 = vmatpush1.bf16.msra.mxu0 %v944
    %996 = vmatprep.subr.bf16.mxu0 0
    %997 = vmatpush1.bf16.msra.mxu0 0
    %998 = vmatprep.subr.bf16.mxu0 0
    %999 = vmatpush1.bf16.msra.mxu0 0
    %1000 = vmatprep.subr.bf16.mxu0 0
    %1001 = vmatpush1.bf16.msra.mxu0 0
    %1002 = vmatprep.subr.bf16.mxu0 0
    %1003 = vmatpush1.bf16.msra.mxu0 0
    %1004 = vmatprep.subr.bf16.mxu0 0
    %1005 = vmatpush1.bf16.msra.mxu0 0
    %1006 = vmatprep.subr.bf16.mxu0 0
    %1007 = vmatpush1.bf16.msra.mxu0 0
    %1008 = vmatprep.subr.bf16.mxu0 0
    %1009 = vmatpush1.bf16.msra.mxu0 0
    %1010 = vmatprep.subr.bf16.mxu0 0
    %1011 = vmatpush1.bf16.msra.mxu0 0
    %1012 = vmatprep.mubr.bf16.mxu0 0
    %1013 = vmatmul.mubr.bf16.gmra.mrb[0].mxu0 %v764
    %v1014 = vpop.f32.mrb[0].mxu0
    %v1015 = vadd.f32 %v803, %v1014
    %v1016 = vpop.f32.mrb[0].mxu0
    %v1017 = vadd.f32 %v807, %v1016
    %v1018 = vpop.f32.mrb[0].mxu0
    %v1019 = vadd.f32 %v803, %v1018
    %v1020 = vpop.f32.mrb[0].mxu0
    %v1021 = vadd.f32 %v807, %v1020
    %1022 = vmatprep.mubr.bf16.mxu0 0
    %1023 = vmatmul.mubr.bf16.gmra.mrb[0].mxu0 %v765
    %v1024 = vpop.f32.mrb[0].mxu0
    %v1025 = vadd.f32 %v803, %v1024
    %v1026 = vpop.f32.mrb[0].mxu0
    %v1027 = vadd.f32 %v807, %v1026
    %v1028 = vpop.f32.mrb[0].mxu0
    %v1029 = vadd.f32 %v803, %v1028
    %v1030 = vpop.f32.mrb[0].mxu0
    %v1031 = vadd.f32 %v807, %v1030
    %1032 = vdwg.mxu0
    %1033 = vmatprep.subr.bf16.mxu0 %v919
    %1034 = vmatpush1.bf16.msra.mxu0 %v918
    %1035 = vmatprep.subr.bf16.mxu0 %v923
    %1036 = vmatpush1.bf16.msra.mxu0 %v922
    %1037 = vmatprep.subr.bf16.mxu0 %v927
    %1038 = vmatpush1.bf16.msra.mxu0 %v926
    %1039 = vmatprep.subr.bf16.mxu0 %v931
    %1040 = vmatpush1.bf16.msra.mxu0 %v930
    %1041 = vmatprep.subr.bf16.mxu0 %v935
    %1042 = vmatpush1.bf16.msra.mxu0 %v934
    %1043 = vmatprep.subr.bf16.mxu0 %v939
    %1044 = vmatpush1.bf16.msra.mxu0 %v938
    %1045 = vmatprep.subr.bf16.mxu0 %v943
    %1046 = vmatpush1.bf16.msra.mxu0 %v942
    %1047 = vmatprep.subr.bf16.mxu0 %v947
    %1048 = vmatpush1.bf16.msra.mxu0 %v946
    %1049 = vmatprep.subr.bf16.mxu0 0
    %1050 = vmatpush1.bf16.msra.mxu0 0
    %1051 = vmatprep.subr.bf16.mxu0 0
    %1052 = vmatpush1.bf16.msra.mxu0 0
    %1053 = vmatprep.subr.bf16.mxu0 0
    %1054 = vmatpush1.bf16.msra.mxu0 0
    %1055 = vmatprep.subr.bf16.mxu0 0
    %1056 = vmatpush1.bf16.msra.mxu0 0
    %1057 = vmatprep.subr.bf16.mxu0 0
    %1058 = vmatpush1.bf16.msra.mxu0 0
    %1059 = vmatprep.subr.bf16.mxu0 0
    %1060 = vmatpush1.bf16.msra.mxu0 0
    %1061 = vmatprep.subr.bf16.mxu0 0
    %1062 = vmatpush1.bf16.msra.mxu0 0
    %1063 = vmatprep.subr.bf16.mxu0 0
    %1064 = vmatpush1.bf16.msra.mxu0 0
    %1065 = vmatprep.mubr.bf16.mxu0 0
    %1066 = vmatmul.mubr.bf16.gmra.mrb[0].mxu0 %v764
    %v1067 = vpop.f32.mrb[0].mxu0
    %v1068 = vadd.f32 %v811, %v1067
    %v1069 = vpop.f32.mrb[0].mxu0
    %v1070 = vadd.f32 %v815, %v1069
    %v1071 = vpop.f32.mrb[0].mxu0
    %v1072 = vadd.f32 %v811, %v1071
    %v1073 = vpop.f32.mrb[0].mxu0
    %v1074 = vadd.f32 %v815, %v1073
    %1075 = vmatprep.mubr.bf16.mxu0 0
    %1076 = vmatmul.mubr.bf16.gmra.mrb[0].mxu0 %v765
    %v1077 = vpop.f32.mrb[0].mxu0
    %v1078 = vadd.f32 %v811, %v1077
    %v1079 = vpop.f32.mrb[0].mxu0
    %v1080 = vadd.f32 %v815, %v1079
    %v1081 = vpop.f32.mrb[0].mxu0
    %v1082 = vadd.f32 %v811, %v1081
    %v1083 = vpop.f32.mrb[0].mxu0
    %v1084 = vadd.f32 %v815, %v1083
    %1085 = vdwg.mxu0
    %v1086 = vmax.f32 %v1015, 0.0
    %v1087 = vmax.f32 %v1017, 0.0
    %v1088 = vmax.f32 %v1068, 0.0
    %v1089 = vmax.f32 %v1070, 0.0
    %v1090 = vmax.f32 %v1019, 0.0
    %v1091 = vmax.f32 %v1021, 0.0
    %v1092 = vmax.f32 %v1072, 0.0
    %v1093 = vmax.f32 %v1074, 0.0
    %v1094 = vmax.f32 %v1025, 0.0
    %v1095 = vmax.f32 %v1027, 0.0
    %v1096 = vmax.f32 %v1078, 0.0
    %v1097 = vmax.f32 %v1080, 0.0
    %v1098 = vmax.f32 %v1029, 0.0
    %v1099 = vmax.f32 %v1031, 0.0
    %v1100 = vmax.f32 %v1082, 0.0
    %v1101 = vmax.f32 %v1084, 0.0
    %v1102 = vld [vmem:[%s1] sm:$0x3]
    %vm1103 = vcmask 261120
    %v1105 = vsel %vm1103, %v1102, 0
    %1107 = vmatprep.subr.mxu0 %v1087
    %1108 = vmatpush1.msra.mxu0 %v1086
    %1109 = vmatprep.subr.mxu0 %v1091
    %1110 = vmatpush1.msra.mxu0 %v1090
    %1111 = vmatprep.subr.mxu0 %v1095
    %1112 = vmatpush1.msra.mxu0 %v1094
    %1113 = vmatprep.subr.mxu0 %v1099
    %1114 = vmatpush1.msra.mxu0 %v1098
    %1115 = vmatprep.subr.mxu0 0.0
    %1116 = vmatpush1.msra.mxu0 0.0
    %1117 = vmatprep.subr.mxu0 0.0
    %1118 = vmatpush1.msra.mxu0 0.0
    %1119 = vmatprep.subr.mxu0 0.0
    %1120 = vmatpush1.msra.mxu0 0.0
    %1121 = vmatprep.subr.mxu0 0.0
    %1122 = vmatpush1.msra.mxu0 0.0
    %1123 = vmatprep.subr.mxu0 0.0
    %1124 = vmatpush1.msra.mxu0 0.0
    %1125 = vmatprep.subr.mxu0 0.0
    %1126 = vmatpush1.msra.mxu0 0.0
    %1127 = vmatprep.subr.mxu0 0.0
    %1128 = vmatpush1.msra.mxu0 0.0
    %1129 = vmatprep.subr.mxu0 0.0
    %1130 = vmatpush1.msra.mxu0 0.0
    %1131 = vmatprep.subr.mxu0 0.0
    %1132 = vmatpush1.msra.mxu0 0.0
    %1133 = vmatprep.subr.mxu0 0.0
    %1134 = vmatpush1.msra.mxu0 0.0
    %1135 = vmatprep.subr.mxu0 0.0
    %1136 = vmatpush1.msra.mxu0 0.0
    %1137 = vmatprep.subr.mxu0 0.0
    %1138 = vmatpush1.msra.mxu0 0.0
    %1139 = vmatprep.subr.mxu0 0.0
    %1140 = vmatpush1.msra.mxu0 0.0
    %1141 = vmatprep.subr.mxu0 0.0
    %1142 = vmatpush1.msra.mxu0 0.0
    %1143 = vmatprep.subr.mxu0 0.0
    %1144 = vmatpush1.msra.mxu0 0.0
    %1145 = vmatprep.subr.mxu0 0.0
    %1146 = vmatpush1.msra.mxu0 0.0
    %1147 = vmatprep.subr.mxu0 0.0
    %1148 = vmatpush1.msra.mxu0 0.0
    %1149 = vmatprep.subr.mxu0 0.0
    %1150 = vmatpush1.msra.mxu0 0.0
    %1151 = vmatprep.subr.mxu0 0.0
    %1152 = vmatpush1.msra.mxu0 0.0
    %1153 = vmatprep.subr.mxu0 0.0
    %1154 = vmatpush1.msra.mxu0 0.0
    %1155 = vmatprep.subr.mxu0 0.0
    %1156 = vmatpush1.msra.mxu0 0.0
    %1157 = vmatprep.subr.mxu0 0.0
    %1158 = vmatpush1.msra.mxu0 0.0
    %1159 = vmatprep.subr.mxu0 0.0
    %1160 = vmatpush1.msra.mxu0 0.0
    %1161 = vmatprep.subr.mxu0 0.0
    %1162 = vmatpush1.msra.mxu0 0.0
    %1163 = vmatprep.subr.mxu0 0.0
    %1164 = vmatpush1.msra.mxu0 0.0
    %1165 = vmatprep.subr.mxu0 0.0
    %1166 = vmatpush1.msra.mxu0 0.0
    %1167 = vmatprep.subr.mxu0 0.0
    %1168 = vmatpush1.msra.mxu0 0.0
    %1169 = vmatprep.subr.mxu0 0.0
    %1170 = vmatpush1.msra.mxu0 0.0
    %1171 = vmatprep.mubr.f32.mxu0 0.0
    %1172 = vmatmul.mubr.f32.gmra.mrb[0].mxu0 %v1105
    %v1173 = vpop.f32.mrb[0].mxu0
    %v1174 = vadd.f32 0.0, %v1173
    %v1175 = vpop.f32.mrb[0].mxu0
    %v1176 = vadd.f32 0.0, %v1175
    %1177 = vdwg.mxu0
    %1178 = vmatprep.subr.mxu0 %v1089
    %1179 = vmatpush1.msra.mxu0 %v1088
    %1180 = vmatprep.subr.mxu0 %v1093
    %1181 = vmatpush1.msra.mxu0 %v1092
    %1182 = vmatprep.subr.mxu0 %v1097
    %1183 = vmatpush1.msra.mxu0 %v1096
    %1184 = vmatprep.subr.mxu0 %v1101
    %1185 = vmatpush1.msra.mxu0 %v1100
    %1186 = vmatprep.subr.mxu0 0.0
    %1187 = vmatpush1.msra.mxu0 0.0
    %1188 = vmatprep.subr.mxu0 0.0
    %1189 = vmatpush1.msra.mxu0 0.0
    %1190 = vmatprep.subr.mxu0 0.0
    %1191 = vmatpush1.msra.mxu0 0.0
    %1192 = vmatprep.subr.mxu0 0.0
    %1193 = vmatpush1.msra.mxu0 0.0
    %1194 = vmatprep.subr.mxu0 0.0
    %1195 = vmatpush1.msra.mxu0 0.0
    %1196 = vmatprep.subr.mxu0 0.0
    %1197 = vmatpush1.msra.mxu0 0.0
    %1198 = vmatprep.subr.mxu0 0.0
    %1199 = vmatpush1.msra.mxu0 0.0
    %1200 = vmatprep.subr.mxu0 0.0
    %1201 = vmatpush1.msra.mxu0 0.0
    %1202 = vmatprep.subr.mxu0 0.0
    %1203 = vmatpush1.msra.mxu0 0.0
    %1204 = vmatprep.subr.mxu0 0.0
    %1205 = vmatpush1.msra.mxu0 0.0
    %1206 = vmatprep.subr.mxu0 0.0
    %1207 = vmatpush1.msra.mxu0 0.0
    %1208 = vmatprep.subr.mxu0 0.0
    %1209 = vmatpush1.msra.mxu0 0.0
    %1210 = vmatprep.subr.mxu0 0.0
    %1211 = vmatpush1.msra.mxu0 0.0
    %1212 = vmatprep.subr.mxu0 0.0
    %1213 = vmatpush1.msra.mxu0 0.0
    %1214 = vmatprep.subr.mxu0 0.0
    %1215 = vmatpush1.msra.mxu0 0.0
    %1216 = vmatprep.subr.mxu0 0.0
    %1217 = vmatpush1.msra.mxu0 0.0
    %1218 = vmatprep.subr.mxu0 0.0
    %1219 = vmatpush1.msra.mxu0 0.0
    %1220 = vmatprep.subr.mxu0 0.0
    %1221 = vmatpush1.msra.mxu0 0.0
    %1222 = vmatprep.subr.mxu0 0.0
    %1223 = vmatpush1.msra.mxu0 0.0
    %1224 = vmatprep.subr.mxu0 0.0
    %1225 = vmatpush1.msra.mxu0 0.0
    %1226 = vmatprep.subr.mxu0 0.0
    %1227 = vmatpush1.msra.mxu0 0.0
    %1228 = vmatprep.subr.mxu0 0.0
    %1229 = vmatpush1.msra.mxu0 0.0
    %1230 = vmatprep.subr.mxu0 0.0
    %1231 = vmatpush1.msra.mxu0 0.0
    %1232 = vmatprep.subr.mxu0 0.0
    %1233 = vmatpush1.msra.mxu0 0.0
    %1234 = vmatprep.subr.mxu0 0.0
    %1235 = vmatpush1.msra.mxu0 0.0
    %1236 = vmatprep.subr.mxu0 0.0
    %1237 = vmatpush1.msra.mxu0 0.0
    %1238 = vmatprep.subr.mxu0 0.0
    %1239 = vmatpush1.msra.mxu0 0.0
    %1240 = vmatprep.subr.mxu0 0.0
    %1241 = vmatpush1.msra.mxu0 0.0
    %1242 = vmatprep.mubr.f32.mxu0 0.0
    %1243 = vmatmul.mubr.f32.gmra.mrb[0].mxu0 %v1105
    %v1244 = vpop.f32.mrb[0].mxu0
    %v1245 = vadd.f32 0.0, %v1244
    %v1246 = vpop.f32.mrb[0].mxu0
    %v1247 = vadd.f32 0.0, %v1246
    %1248 = vdwg.mxu0
    %v1253 = vcombine.low %v1174, %v1176
    %v1254 = vcombine.low %v1245, %v1247
    %v1256 = vunpack.c.l.s4 1983009808
    %v1257 = vunpack.c.0.s8 %v1256
    %v1258 = vlaneseq
    %v1259 = vshrl.u32 %v1258, 7
    %v1260 = vsub.s32 %v1257, %v1259
    %v1261 = vrot.slane %v1253, %v1260
    %v1263 = vunpack.c.l.s4 1983009808
    %v1264 = vunpack.c.0.s8 %v1263
    %v1265 = vlaneseq
    %v1266 = vshrl.u32 %v1265, 7
    %v1267 = vsub.s32 %v1264, %v1266
    %v1268 = vrot.slane %v1254, %v1267
    %v1269 = vcombine.low %v1261, %v1268
    %1271 = vst [vmem:[%s10] sm:$0xff] %v1269
    %v1272 = vpack.c.bf16 %v1174, %v1174
    %v1273 = vpack.c.bf16 %v1176, %v1176
    %v1274 = vpack.c.bf16 %v1245, %v1245
    %v1275 = vpack.c.bf16 %v1247, %v1247
    %v1276 = vld [vmem:[%s8] sm:$0xf]
    %v1277 = vld [vmem:[%s8 + $0x4] sm:$0xf]
    %v1278 = vld [vmem:[%s8 + $0x8] sm:$0xf]
    %v1279 = vld [vmem:[%s8 + $0xc] sm:$0xf]
    %v1280 = vld [vmem:[%s8 + $0x10] sm:$0xf]
    %v1281 = vld [vmem:[%s8 + $0x14] sm:$0xf]
    %v1282 = vld [vmem:[%s8 + $0x18] sm:$0xf]
    %v1283 = vld [vmem:[%s8 + $0x1c] sm:$0xf]
    %v1284 = vld [vmem:[%s8 + $0x20] sm:$0xf]
    %v1285 = vld [vmem:[%s8 + $0x24] sm:$0xf]
    %v1286 = vld [vmem:[%s8 + $0x28] sm:$0xf]
    %v1287 = vld [vmem:[%s8 + $0x2c] sm:$0xf]
    %v1288 = vld [vmem:[%s8 + $0x30] sm:$0xf]
    %v1289 = vld [vmem:[%s8 + $0x34] sm:$0xf]
    %v1290 = vld [vmem:[%s8 + $0x38] sm:$0xf]
    %v1291 = vld [vmem:[%s8 + $0x3c] sm:$0xf]
    %v1292 = vld [vmem:[%s8 + $0x40] sm:$0xf]
    %v1293 = vld [vmem:[%s8 + $0x44] sm:$0xf]
    %v1294 = vld [vmem:[%s8 + $0x48] sm:$0xf]
    %v1295 = vld [vmem:[%s8 + $0x4c] sm:$0xf]
    %v1296 = vld [vmem:[%s8 + $0x50] sm:$0xf]
    %v1297 = vld [vmem:[%s8 + $0x54] sm:$0xf]
    %v1298 = vld [vmem:[%s8 + $0x58] sm:$0xf]
    %v1299 = vld [vmem:[%s8 + $0x5c] sm:$0xf]
    %v1300 = vld [vmem:[%s8 + $0x60] sm:$0xf]
    %v1301 = vld [vmem:[%s8 + $0x64] sm:$0xf]
    %v1302 = vld [vmem:[%s8 + $0x68] sm:$0xf]
    %v1303 = vld [vmem:[%s8 + $0x6c] sm:$0xf]
    %v1304 = vld [vmem:[%s8 + $0x70] sm:$0xf]
    %v1305 = vld [vmem:[%s8 + $0x74] sm:$0xf]
    %v1306 = vld [vmem:[%s8 + $0x78] sm:$0xf]
    %v1307 = vld [vmem:[%s8 + $0x7c] sm:$0xf]
    %v1308 = vld [vmem:[%s8 + $0x80] sm:$0xf]
    %v1309 = vld [vmem:[%s8 + $0x84] sm:$0xf]
    %v1310 = vld [vmem:[%s8 + $0x88] sm:$0xf]
    %v1311 = vld [vmem:[%s8 + $0x8c] sm:$0xf]
    %v1312 = vld [vmem:[%s8 + $0x90] sm:$0xf]
    %v1313 = vld [vmem:[%s8 + $0x94] sm:$0xf]
    %v1314 = vld [vmem:[%s8 + $0x98] sm:$0xf]
    %v1315 = vld [vmem:[%s8 + $0x9c] sm:$0xf]
    %v1316 = vld [vmem:[%s8 + $0xa0] sm:$0xf]
    %v1317 = vld [vmem:[%s8 + $0xa4] sm:$0xf]
    %v1318 = vld [vmem:[%s8 + $0xa8] sm:$0xf]
    %v1319 = vld [vmem:[%s8 + $0xac] sm:$0xf]
    %v1320 = vld [vmem:[%s8 + $0xb0] sm:$0xf]
    %v1321 = vld [vmem:[%s8 + $0xb4] sm:$0xf]
    %v1322 = vld [vmem:[%s8 + $0xb8] sm:$0xf]
    %v1323 = vld [vmem:[%s8 + $0xbc] sm:$0xf]
    %v1324 = vld [vmem:[%s8 + $0xc0] sm:$0xf]
    %v1325 = vld [vmem:[%s8 + $0xc4] sm:$0xf]
    %v1326 = vld [vmem:[%s8 + $0xc8] sm:$0xf]
    %v1327 = vld [vmem:[%s8 + $0xcc] sm:$0xf]
    %v1328 = vld [vmem:[%s8 + $0xd0] sm:$0xf]
    %v1329 = vld [vmem:[%s8 + $0xd4] sm:$0xf]
    %v1330 = vld [vmem:[%s8 + $0xd8] sm:$0xf]
    %v1331 = vld [vmem:[%s8 + $0xdc] sm:$0xf]
    %v1332 = vld [vmem:[%s8 + $0xe0] sm:$0xf]
    %v1333 = vld [vmem:[%s8 + $0xe4] sm:$0xf]
    %v1334 = vld [vmem:[%s8 + $0xe8] sm:$0xf]
    %v1335 = vld [vmem:[%s8 + $0xec] sm:$0xf]
    %v1336 = vld [vmem:[%s8 + $0xf0] sm:$0xf]
    %v1337 = vld [vmem:[%s8 + $0xf4] sm:$0xf]
    %v1338 = vld [vmem:[%s8 + $0xf8] sm:$0xf]
    %v1339 = vld [vmem:[%s8 + $0xfc] sm:$0xf]
    %v1340 = vld [vmem:[%s9] sm:$0x1]
    %v1342 = vlaneseq
    %v1343 = vshrl.u32 %v1342, 7
    %v1344 = vsub.s32 0, %v1343
    %v1345 = vrot.slane %v1340, %v1344
    %v1411 = vunpack.c.l.b16 %v1276
    %v1412 = vunpack.c.l.b16 %v1277
    %v1413 = vunpack.c.l.b16 %v1278
    %v1414 = vunpack.c.l.b16 %v1279
    %v1415 = vunpack.c.l.b16 %v1280
    %v1416 = vunpack.c.l.b16 %v1281
    %v1417 = vunpack.c.l.b16 %v1282
    %v1418 = vunpack.c.l.b16 %v1283
    %v1419 = vunpack.c.l.b16 %v1284
    %v1420 = vunpack.c.l.b16 %v1285
    %v1421 = vunpack.c.l.b16 %v1286
    %v1422 = vunpack.c.l.b16 %v1287
    %v1423 = vunpack.c.l.b16 %v1288
    %v1424 = vunpack.c.l.b16 %v1289
    %v1425 = vunpack.c.l.b16 %v1290
    %v1426 = vunpack.c.l.b16 %v1291
    %v1427 = vunpack.c.l.b16 %v1292
    %v1428 = vunpack.c.l.b16 %v1293
    %v1429 = vunpack.c.l.b16 %v1294
    %v1430 = vunpack.c.l.b16 %v1295
    %v1431 = vunpack.c.l.b16 %v1296
    %v1432 = vunpack.c.l.b16 %v1297
    %v1433 = vunpack.c.l.b16 %v1298
    %v1434 = vunpack.c.l.b16 %v1299
    %v1435 = vunpack.c.l.b16 %v1300
    %v1436 = vunpack.c.l.b16 %v1301
    %v1437 = vunpack.c.l.b16 %v1302
    %v1438 = vunpack.c.l.b16 %v1303
    %v1439 = vunpack.c.l.b16 %v1304
    %v1440 = vunpack.c.l.b16 %v1305
    %v1441 = vunpack.c.l.b16 %v1306
    %v1442 = vunpack.c.l.b16 %v1307
    %v1443 = vunpack.c.l.b16 %v1308
    %v1444 = vunpack.c.l.b16 %v1309
    %v1445 = vunpack.c.l.b16 %v1310
    %v1446 = vunpack.c.l.b16 %v1311
    %v1447 = vunpack.c.l.b16 %v1312
    %v1448 = vunpack.c.l.b16 %v1313
    %v1449 = vunpack.c.l.b16 %v1314
    %v1450 = vunpack.c.l.b16 %v1315
    %v1451 = vunpack.c.l.b16 %v1316
    %v1452 = vunpack.c.l.b16 %v1317
    %v1453 = vunpack.c.l.b16 %v1318
    %v1454 = vunpack.c.l.b16 %v1319
    %v1455 = vunpack.c.l.b16 %v1320
    %v1456 = vunpack.c.l.b16 %v1321
    %v1457 = vunpack.c.l.b16 %v1322
    %v1458 = vunpack.c.l.b16 %v1323
    %v1459 = vunpack.c.l.b16 %v1324
    %v1460 = vunpack.c.l.b16 %v1325
    %v1461 = vunpack.c.l.b16 %v1326
    %v1462 = vunpack.c.l.b16 %v1327
    %v1463 = vunpack.c.l.b16 %v1328
    %v1464 = vunpack.c.l.b16 %v1329
    %v1465 = vunpack.c.l.b16 %v1330
    %v1466 = vunpack.c.l.b16 %v1331
    %v1467 = vunpack.c.l.b16 %v1332
    %v1468 = vunpack.c.l.b16 %v1333
    %v1469 = vunpack.c.l.b16 %v1334
    %v1470 = vunpack.c.l.b16 %v1335
    %v1471 = vunpack.c.l.b16 %v1336
    %v1472 = vunpack.c.l.b16 %v1337
    %v1473 = vunpack.c.l.b16 %v1338
    %v1474 = vunpack.c.l.b16 %v1339
    %v1475 = vpack.c.b16 %v1412, %v1411
    %v1476 = vpack.c.b16 %v1414, %v1413
    %v1477 = vpack.c.b16 %v1416, %v1415
    %v1478 = vpack.c.b16 %v1418, %v1417
    %v1479 = vpack.c.b16 %v1420, %v1419
    %v1480 = vpack.c.b16 %v1422, %v1421
    %v1481 = vpack.c.b16 %v1424, %v1423
    %v1482 = vpack.c.b16 %v1426, %v1425
    %v1483 = vpack.c.b16 %v1428, %v1427
    %v1484 = vpack.c.b16 %v1430, %v1429
    %v1485 = vpack.c.b16 %v1432, %v1431
    %v1486 = vpack.c.b16 %v1434, %v1433
    %v1487 = vpack.c.b16 %v1436, %v1435
    %v1488 = vpack.c.b16 %v1438, %v1437
    %v1489 = vpack.c.b16 %v1440, %v1439
    %v1490 = vpack.c.b16 %v1442, %v1441
    %v1491 = vpack.c.b16 %v1444, %v1443
    %v1492 = vpack.c.b16 %v1446, %v1445
    %v1493 = vpack.c.b16 %v1448, %v1447
    %v1494 = vpack.c.b16 %v1450, %v1449
    %v1495 = vpack.c.b16 %v1452, %v1451
    %v1496 = vpack.c.b16 %v1454, %v1453
    %v1497 = vpack.c.b16 %v1456, %v1455
    %v1498 = vpack.c.b16 %v1458, %v1457
    %v1499 = vpack.c.b16 %v1460, %v1459
    %v1500 = vpack.c.b16 %v1462, %v1461
    %v1501 = vpack.c.b16 %v1464, %v1463
    %v1502 = vpack.c.b16 %v1466, %v1465
    %v1503 = vpack.c.b16 %v1468, %v1467
    %v1504 = vpack.c.b16 %v1470, %v1469
    %v1505 = vpack.c.b16 %v1472, %v1471
    %v1506 = vpack.c.b16 %v1474, %v1473
    %1539 = vmatprep.subr.bf16.mxu0 0
    %1540 = vmatpush1.bf16.msra.mxu0 %v1475
    %1541 = vmatprep.subr.bf16.mxu0 0
    %1542 = vmatpush1.bf16.msra.mxu0 %v1476
    %1543 = vmatprep.subr.bf16.mxu0 0
    %1544 = vmatpush1.bf16.msra.mxu0 %v1477
    %1545 = vmatprep.subr.bf16.mxu0 0
    %1546 = vmatpush1.bf16.msra.mxu0 %v1478
    %1547 = vmatprep.subr.bf16.mxu0 0
    %1548 = vmatpush1.bf16.msra.mxu0 %v1479
    %1549 = vmatprep.subr.bf16.mxu0 0
    %1550 = vmatpush1.bf16.msra.mxu0 %v1480
    %1551 = vmatprep.subr.bf16.mxu0 0
    %1552 = vmatpush1.bf16.msra.mxu0 %v1481
    %1553 = vmatprep.subr.bf16.mxu0 0
    %1554 = vmatpush1.bf16.msra.mxu0 %v1482
    %1555 = vmatprep.subr.bf16.mxu0 0
    %1556 = vmatpush1.bf16.msra.mxu0 %v1483
    %1557 = vmatprep.subr.bf16.mxu0 0
    %1558 = vmatpush1.bf16.msra.mxu0 %v1484
    %1559 = vmatprep.subr.bf16.mxu0 0
    %1560 = vmatpush1.bf16.msra.mxu0 %v1485
    %1561 = vmatprep.subr.bf16.mxu0 0
    %1562 = vmatpush1.bf16.msra.mxu0 %v1486
    %1563 = vmatprep.subr.bf16.mxu0 0
    %1564 = vmatpush1.bf16.msra.mxu0 %v1487
    %1565 = vmatprep.subr.bf16.mxu0 0
    %1566 = vmatpush1.bf16.msra.mxu0 %v1488
    %1567 = vmatprep.subr.bf16.mxu0 0
    %1568 = vmatpush1.bf16.msra.mxu0 %v1489
    %1569 = vmatprep.subr.bf16.mxu0 0
    %1570 = vmatpush1.bf16.msra.mxu0 %v1490
    %1571 = vmatprep.mubr.bf16.mxu0 %v1273
    %1572 = vmatmul.mubr.bf16.gmra.mrb[0].mxu0 %v1272
    %v1573 = vpop.f32.mrb[0].mxu0
    %v1574 = vadd.f32 %v1345, %v1573
    %v1575 = vpop.f32.mrb[0].mxu0
    %v1576 = vpop.f32.mrb[0].mxu0
    %v1577 = vpop.f32.mrb[0].mxu0
    %1578 = vdwg.mxu0
    %1579 = vmatprep.subr.bf16.mxu0 0
    %1580 = vmatpush1.bf16.msra.mxu0 %v1491
    %1581 = vmatprep.subr.bf16.mxu0 0
    %1582 = vmatpush1.bf16.msra.mxu0 %v1492
    %1583 = vmatprep.subr.bf16.mxu0 0
    %1584 = vmatpush1.bf16.msra.mxu0 %v1493
    %1585 = vmatprep.subr.bf16.mxu0 0
    %1586 = vmatpush1.bf16.msra.mxu0 %v1494
    %1587 = vmatprep.subr.bf16.mxu0 0
    %1588 = vmatpush1.bf16.msra.mxu0 %v1495
    %1589 = vmatprep.subr.bf16.mxu0 0
    %1590 = vmatpush1.bf16.msra.mxu0 %v1496
    %1591 = vmatprep.subr.bf16.mxu0 0
    %1592 = vmatpush1.bf16.msra.mxu0 %v1497
    %1593 = vmatprep.subr.bf16.mxu0 0
    %1594 = vmatpush1.bf16.msra.mxu0 %v1498
    %1595 = vmatprep.subr.bf16.mxu0 0
    %1596 = vmatpush1.bf16.msra.mxu0 %v1499
    %1597 = vmatprep.subr.bf16.mxu0 0
    %1598 = vmatpush1.bf16.msra.mxu0 %v1500
    %1599 = vmatprep.subr.bf16.mxu0 0
    %1600 = vmatpush1.bf16.msra.mxu0 %v1501
    %1601 = vmatprep.subr.bf16.mxu0 0
    %1602 = vmatpush1.bf16.msra.mxu0 %v1502
    %1603 = vmatprep.subr.bf16.mxu0 0
    %1604 = vmatpush1.bf16.msra.mxu0 %v1503
    %1605 = vmatprep.subr.bf16.mxu0 0
    %1606 = vmatpush1.bf16.msra.mxu0 %v1504
    %1607 = vmatprep.subr.bf16.mxu0 0
    %1608 = vmatpush1.bf16.msra.mxu0 %v1505
    %1609 = vmatprep.subr.bf16.mxu0 0
    %1610 = vmatpush1.bf16.msra.mxu0 %v1506
    %1611 = vmatprep.mubr.bf16.mxu0 %v1275
    %1612 = vmatmul.mubr.bf16.gmra.mrb[0].mxu0 %v1274
    %v1613 = vpop.f32.mrb[0].mxu0
    %v1614 = vadd.f32 %v1574, %v1613
    %v1615 = vpop.f32.mrb[0].mxu0
    %v1616 = vpop.f32.mrb[0].mxu0
    %v1617 = vpop.f32.mrb[0].mxu0
    %1618 = vdwg.mxu0
    %1619 = vst [vmem:[#allocation2] sm:$0x3] %v1614
    // Predicated region
    $region42: #{_lambda_.1} parent=1 // pred_check
      _
    $region43: #{_lambda_.1} parent=1 // pred_check_branch
      %1621 = sbr.rel (0) target = $region45
    $region44: #{_lambda_.1} parent=1 // pred_region
      _
    $region45: #{_lambda_.1} parent=1 // pred_fallthru
      _
    // Predicated region
    $region46: #{_lambda_.1} parent=1 // pred_check
      _
    $region47: #{_lambda_.1} parent=1 // pred_check_branch
      %1623 = sbr.rel (0) target = $region49
    $region48: #{_lambda_.1} parent=1 // pred_region
      %s1625 = ssub.s32 32, 32
      %1626 = vsyncadd [#allocation3], %s1625
      %s1628 = sshll.u32 [#allocation2], 4
      %s1629 = int_to_ptr.vmem [resolvable:$true] %s1628
      %1631 = dma.vmem_to_hbm [thread:$0]  %s1629, 32, %s11, [#allocation3]
    $region49: #{_lambda_.1} parent=1 // pred_fallthru
      _
    // Predicated region
    $region50: #{_lambda_.1} parent=1 // pred_check
      _
    $region51: #{_lambda_.1} parent=1 // pred_check_branch
      %1633 = sbr.rel (0) target = $region53
    $region52: #{_lambda_.1} parent=1 // pred_region
      _
    $region53: #{_lambda_.1} parent=1 // pred_fallthru
      _
    // Predicated region
    $region54: #{_lambda_.1} parent=1 // pred_check
      _
    $region55: #{_lambda_.1} parent=1 // pred_check_branch
      %1635 = sbr.rel (0) target = $region57
    $region56: #{_lambda_.1} parent=1 // pred_region
      %1636 = dma.done [#allocation3], 32
    $region57: #{_lambda_.1} parent=1 // pred_fallthru
      _
    %1637 = vsyncpa [#allocation3], 1

</llo_original>
